<compile_context>
chip_gen: v7x
topology: tpu7x:2x2x1
jax: 0.10.0
libtpu: 0.0.40
codegen_flags: <defaults>
</compile_context>

<pallas_src>
import functools
import math

import jax
import jax.numpy as jnp
from jax.experimental import pallas as pl
from jax.experimental.pallas import tpu as pltpu


_TARGET_BLOCK_BYTES = 1 << 20          # ~1 MiB blocks: large DMAs, small overhead
_VMEM_LIMIT_BYTES = 32 * 1024 * 1024   # explicit scoped-VMEM limit (v5e..v7x safe)


def _largest_tile(total, unit, cap):
    """Largest tile t for an axis of length `total`:
       - the whole axis if it fits the cap (always legal: block == full dim), or
       - the largest multiple-of-`unit` divisor of `total` that is <= cap, or
       - (fallback) a multiple-of-`unit` non-divisor; the ragged last block is
         handled by Pallas (padded reads / masked writes) and every lane/row is
         independent in this kernel."""
    if total <= cap:
        return total
    t = max(unit, (cap // unit) * unit)
    cand = t
    while t >= unit:
        if total % t == 0:
            return t
        t -= unit
    return cand


def _conv1d_kernel(w_ref, x_ref, o_ref, *, K, L, pad_lo, reflect, axis):
    """1-D cross-correlation along `axis` of the block; halo built in-kernel.

    w_ref : (K,) float32 taps in SMEM
    x_ref : input block in VMEM; the conv axis carries the full length L
    o_ref : output block (same shape, float32), accumulated in place
    """
    nd = len(x_ref.shape)

    def ix(start, size):
        idx = [slice(None)] * nd
        idx[axis] = pl.ds(start, size)
        return tuple(idx)

    # The zero-shift tap covers every output position -> use it to initialise
    # the output block (saves a separate zero-fill pass over VMEM).
    o_ref[...] = w_ref[pad_lo] * x_ref[...]

    for k in range(K):
        if k == pad_lo:
            continue
        w = w_ref[k]
        d = k - pad_lo                      # shift of this tap
        lo = max(0, -d)                     # first output index with in-range read
        hi = min(L, L - d)                  # one past the last such index
        if hi > lo:
            # Bulk of the tap: a fresh per-tap VMEM ref slice (static offsets),
            # accumulated straight into the output block.
            o_ref[ix(lo, hi - lo)] += w * x_ref[ix(lo + d, hi - lo)]
        for i in range(L):                  # border positions (< K of them)
            if lo <= i < hi:
                continue
            src = i + d                     # guaranteed out of [0, L) here
            if reflect:                     # 'reflect' (no edge repeat)
                src = -src if src < 0 else 2 * (L - 1) - src
            else:                           # 'replicate' / 'edge'
                src = 0 if src < 0 else L - 1
            o_ref[ix(i, 1)] += w * x_ref[ix(src, 1)]


def _conv_last_axis(x2d, w, *, K, pad_lo, reflect):
    """Conv along the last (lane) axis of a (M, L) view."""
    M, L = x2d.shape
    row_bytes = max(1, L * 4)
    tm_cap = max(8, _TARGET_BLOCK_BYTES // row_bytes)
    TM = _largest_tile(M, 8, tm_cap)
    grid = (pl.cdiv(M, TM),)

    kernel = functools.partial(
        _conv1d_kernel, K=K, L=L, pad_lo=pad_lo, reflect=reflect, axis=1)
    return pl.pallas_call(
        kernel,
        out_shape=jax.ShapeDtypeStruct((M, L), x2d.dtype),
        grid=grid,
        in_specs=[
            pl.BlockSpec(memory_space=pltpu.MemorySpace.SMEM),     # taps
            pl.BlockSpec((TM, L), lambda i: (i, 0)),               # input rows
        ],
        out_specs=pl.BlockSpec((TM, L), lambda i: (i, 0)),
        compiler_params=pltpu.CompilerParams(
            dimension_semantics=("parallel",),
            vmem_limit_bytes=_VMEM_LIMIT_BYTES),
    )(w, x2d)


def _conv_middle_axis(x3d, w, *, K, pad_lo, reflect):
    """Conv along the middle (sublane) axis of a (P, L, S) view; S on lanes."""
    P, L, S = x3d.shape
    lane_cap = max(128, _TARGET_BLOCK_BYTES // max(1, L * 4))
    TS = _largest_tile(S, 128, lane_cap)
    grid = (P, pl.cdiv(S, TS))

    kernel = functools.partial(
        _conv1d_kernel, K=K, L=L, pad_lo=pad_lo, reflect=reflect, axis=0)
    return pl.pallas_call(
        kernel,
        out_shape=jax.ShapeDtypeStruct((P, L, S), x3d.dtype),
        grid=grid,
        in_specs=[
            pl.BlockSpec(memory_space=pltpu.MemorySpace.SMEM),          # taps
            pl.BlockSpec((None, L, TS), lambda p, s: (p, 0, s)),        # input
        ],
        out_specs=pl.BlockSpec((None, L, TS), lambda p, s: (p, 0, s)),
        compiler_params=pltpu.CompilerParams(
            dimension_semantics=("parallel", "parallel"),
            vmem_limit_bytes=_VMEM_LIMIT_BYTES),
    )(w, x3d)


def convn_layer_forward(x, kernel, dim):
    """JAX/Pallas equivalent of convn_layer_torch.forward for 4D NCHW inputs."""
    ndim = x.ndim
    assert ndim == 4, "this implementation handles the 4D (B, C, H, W) path"
    if dim < 0:
        dim += ndim
    assert 0 <= dim < ndim

    # filter2D path (reflect) for the spatial dims, filter3D path (replicate)
    # for batch / channel -- exactly as dispatched by convn_layer_torch.
    reflect = dim in (2, 3)

    K = int(kernel.shape[0])
    pad_lo = K // 2                       # right reach is (K-1)//2 implicitly

    orig_dtype = x.dtype
    xf = x.astype(jnp.float32)            # compute in f32 (matches f32 test path)
    w = kernel.reshape(-1).astype(jnp.float32)

    shape = x.shape
    L = shape[dim]
    if dim == ndim - 1:
        # Conv axis is already the contiguous last axis -> lane conv.
        M = math.prod(shape[:dim])
        out = _conv_last_axis(xf.reshape(M, L), w,
                              K=K, pad_lo=pad_lo, reflect=reflect)
    else:
        # Conv along sublanes; the contiguous suffix stays on lanes (no
        # transpose pass in HBM, lane-dense stores for dim 0/1).
        P = math.prod(shape[:dim])
        S = math.prod(shape[dim + 1:])
        out = _conv_middle_axis(xf.reshape(P, L, S), w,
                                K=K, pad_lo=pad_lo, reflect=reflect)
    return out.reshape(shape).astype(orig_dtype)


def _reference(x, kernel, dim):
    """Pure-JAX reference (same math as the PyTorch module)."""
    ndim = x.ndim
    if dim < 0:
        dim += ndim
    mode = "reflect" if dim in (2, 3) else "edge"
    K = int(kernel.shape[0])
    xm = jnp.moveaxis(x, dim, -1)
    L = xm.shape[-1]
    pads = [(0, 0)] * (ndim - 1) + [(K // 2, (K - 1) // 2)]
    xpad = jnp.pad(xm, pads, mode=mode)
    out = sum(kernel[k] * xpad[..., k:k + L] for k in range(K))
    return jnp.moveaxis(out, -1, dim)


if __name__ == "__main__":
    key = jax.random.PRNGKey(0)
    kx, kk = jax.random.split(key)

    x = jax.random.normal(kx, (2, 4, 16, 16), dtype=jnp.float32)
    kern_odd = jax.random.normal(kk, (5,), dtype=jnp.float32)    # odd-length taps
    kern_even = jax.random.normal(kk, (4,), dtype=jnp.float32)   # even-length taps

    ok = True
    for kern in (kern_odd, kern_even):
        for dim in (3, 2, 1, 0, -1):
            out = jax.block_until_ready(convn_layer_forward(x, kern, dim))
            ref = _reference(x, kern, dim)
            ok &= out.shape == x.shape
            ok &= bool(jnp.allclose(out, ref, atol=1e-5, rtol=1e-5))

    if ok:
        print("KERNEL_OK")
    else:
        print("KERNEL_MISMATCH")
</pallas_src>

<mosaic_0001>
module attributes {stable_mosaic.version = 11 : i64} {
  func.func @_conv1d_kernel(%arg0: i32, %arg1: memref<5xf32, #tpu.memory_space<smem>>, %arg2: memref<128x16xf32, #tpu.memory_space<vmem>>, %arg3: memref<128x16xf32, #tpu.memory_space<vmem>>) attributes {dimension_semantics = [#tpu.dimension_semantics<parallel>], iteration_bounds = array<i64: 1>, scalar_prefetch = 0 : i64, scratch_operands = 0 : i64, tpu.core_type = #tpu.core_type<tc>, window_params = [{transform_indices = @transform_0, window_bounds = array<i64: 5>}, {transform_indices = @transform_1, window_bounds = array<i64: 128, 16>}, {transform_indices = @transform_2, window_bounds = array<i64: 128, 16>}]} {
    %c2 = arith.constant 2 : index
    %0 = memref.load %arg1[%c2] : memref<5xf32, #tpu.memory_space<smem>>
    %c0 = arith.constant 0 : index
    %c0_0 = arith.constant 0 : index
    %1 = vector.load %arg2[%c0, %c0_0] : memref<128x16xf32, #tpu.memory_space<vmem>>, vector<128x16xf32>
    %2 = vector.broadcast %0 : f32 to vector<128x16xf32>
    %3 = arith.mulf %2, %1 : vector<128x16xf32>
    %c0_1 = arith.constant 0 : index
    %c0_2 = arith.constant 0 : index
    %4 = vector.load %arg3[%c0_1, %c0_2] : memref<128x16xf32, #tpu.memory_space<vmem>>, vector<128x16xf32>
    tpu.vector_store %arg3[%c0_1, %c0_2], %3 {strides = array<i32>} : memref<128x16xf32, #tpu.memory_space<vmem>>, vector<128x16xf32>,
    %c0_3 = arith.constant 0 : index
    %5 = memref.load %arg1[%c0_3] : memref<5xf32, #tpu.memory_space<smem>>
    %c0_4 = arith.constant 0 : index
    %c2_5 = arith.constant 2 : index
    %6 = vector.load %arg3[%c0_4, %c2_5] : memref<128x16xf32, #tpu.memory_space<vmem>>, vector<128x14xf32>
    %c0_6 = arith.constant 0 : index
    %c0_7 = arith.constant 0 : index
    %7 = vector.load %arg2[%c0_6, %c0_7] : memref<128x16xf32, #tpu.memory_space<vmem>>, vector<128x14xf32>
    %8 = vector.broadcast %5 : f32 to vector<128x14xf32>
    %9 = arith.mulf %8, %7 : vector<128x14xf32>
    %10 = arith.addf %6, %9 : vector<128x14xf32>
    %c0_8 = arith.constant 0 : index
    %c2_9 = arith.constant 2 : index
    %11 = vector.load %arg3[%c0_8, %c2_9] : memref<128x16xf32, #tpu.memory_space<vmem>>, vector<128x14xf32>
    tpu.vector_store %arg3[%c0_8, %c2_9], %10 {strides = array<i32>} : memref<128x16xf32, #tpu.memory_space<vmem>>, vector<128x14xf32>,
    %c0_10 = arith.constant 0 : index
    %c0_11 = arith.constant 0 : index
    %12 = vector.load %arg3[%c0_10, %c0_11] : memref<128x16xf32, #tpu.memory_space<vmem>>, vector<128x1xf32>
    %c0_12 = arith.constant 0 : index
    %c2_13 = arith.constant 2 : index
    %13 = vector.load %arg2[%c0_12, %c2_13] : memref<128x16xf32, #tpu.memory_space<vmem>>, vector<128x1xf32>
    %14 = vector.broadcast %5 : f32 to vector<128x1xf32>
    %15 = arith.mulf %14, %13 : vector<128x1xf32>
    %16 = arith.addf %12, %15 : vector<128x1xf32>
    %c0_14 = arith.constant 0 : index
    %c0_15 = arith.constant 0 : index
    %17 = vector.load %arg3[%c0_14, %c0_15] : memref<128x16xf32, #tpu.memory_space<vmem>>, vector<128x1xf32>
    tpu.vector_store %arg3[%c0_14, %c0_15], %16 {strides = array<i32>} : memref<128x16xf32, #tpu.memory_space<vmem>>, vector<128x1xf32>,
    %c0_16 = arith.constant 0 : index
    %c1 = arith.constant 1 : index
    %18 = vector.load %arg3[%c0_16, %c1] : memref<128x16xf32, #tpu.memory_space<vmem>>, vector<128x1xf32>
    %c0_17 = arith.constant 0 : index
    %c1_18 = arith.constant 1 : index
    %19 = vector.load %arg2[%c0_17, %c1_18] : memref<128x16xf32, #tpu.memory_space<vmem>>, vector<128x1xf32>
    %20 = vector.broadcast %5 : f32 to vector<128x1xf32>
    %21 = arith.mulf %20, %19 : vector<128x1xf32>
    %22 = arith.addf %18, %21 : vector<128x1xf32>
    %c0_19 = arith.constant 0 : index
    %c1_20 = arith.constant 1 : index
    %23 = vector.load %arg3[%c0_19, %c1_20] : memref<128x16xf32, #tpu.memory_space<vmem>>, vector<128x1xf32>
    tpu.vector_store %arg3[%c0_19, %c1_20], %22 {strides = array<i32>} : memref<128x16xf32, #tpu.memory_space<vmem>>, vector<128x1xf32>,
    %c1_21 = arith.constant 1 : index
    %24 = memref.load %arg1[%c1_21] : memref<5xf32, #tpu.memory_space<smem>>
    %c0_22 = arith.constant 0 : index
    %c1_23 = arith.constant 1 : index
    %25 = vector.load %arg3[%c0_22, %c1_23] : memref<128x16xf32, #tpu.memory_space<vmem>>, vector<128x15xf32>
    %c0_24 = arith.constant 0 : index
    %c0_25 = arith.constant 0 : index
    %26 = vector.load %arg2[%c0_24, %c0_25] : memref<128x16xf32, #tpu.memory_space<vmem>>, vector<128x15xf32>
    %27 = vector.broadcast %24 : f32 to vector<128x15xf32>
    %28 = arith.mulf %27, %26 : vector<128x15xf32>
    %29 = arith.addf %25, %28 : vector<128x15xf32>
    %c0_26 = arith.constant 0 : index
    %c1_27 = arith.constant 1 : index
    %30 = vector.load %arg3[%c0_26, %c1_27] : memref<128x16xf32, #tpu.memory_space<vmem>>, vector<128x15xf32>
    tpu.vector_store %arg3[%c0_26, %c1_27], %29 {strides = array<i32>} : memref<128x16xf32, #tpu.memory_space<vmem>>, vector<128x15xf32>,
    %c0_28 = arith.constant 0 : index
    %c0_29 = arith.constant 0 : index
    %31 = vector.load %arg3[%c0_28, %c0_29] : memref<128x16xf32, #tpu.memory_space<vmem>>, vector<128x1xf32>
    %c0_30 = arith.constant 0 : index
    %c1_31 = arith.constant 1 : index
    %32 = vector.load %arg2[%c0_30, %c1_31] : memref<128x16xf32, #tpu.memory_space<vmem>>, vector<128x1xf32>
    %33 = vector.broadcast %24 : f32 to vector<128x1xf32>
    %34 = arith.mulf %33, %32 : vector<128x1xf32>
    %35 = arith.addf %31, %34 : vector<128x1xf32>
    %c0_32 = arith.constant 0 : index
    %c0_33 = arith.constant 0 : index
    %36 = vector.load %arg3[%c0_32, %c0_33] : memref<128x16xf32, #tpu.memory_space<vmem>>, vector<128x1xf32>
    tpu.vector_store %arg3[%c0_32, %c0_33], %35 {strides = array<i32>} : memref<128x16xf32, #tpu.memory_space<vmem>>, vector<128x1xf32>,
    %c3 = arith.constant 3 : index
    %37 = memref.load %arg1[%c3] : memref<5xf32, #tpu.memory_space<smem>>
    %c0_34 = arith.constant 0 : index
    %c0_35 = arith.constant 0 : index
    %38 = vector.load %arg3[%c0_34, %c0_35] : memref<128x16xf32, #tpu.memory_space<vmem>>, vector<128x15xf32>
    %c0_36 = arith.constant 0 : index
    %c1_37 = arith.constant 1 : index
    %39 = vector.load %arg2[%c0_36, %c1_37] : memref<128x16xf32, #tpu.memory_space<vmem>>, vector<128x15xf32>
    %40 = vector.broadcast %37 : f32 to vector<128x15xf32>
    %41 = arith.mulf %40, %39 : vector<128x15xf32>
    %42 = arith.addf %38, %41 : vector<128x15xf32>
    %c0_38 = arith.constant 0 : index
    %c0_39 = arith.constant 0 : index
    %43 = vector.load %arg3[%c0_38, %c0_39] : memref<128x16xf32, #tpu.memory_space<vmem>>, vector<128x15xf32>
    tpu.vector_store %arg3[%c0_38, %c0_39], %42 {strides = array<i32>} : memref<128x16xf32, #tpu.memory_space<vmem>>, vector<128x15xf32>,
    %c0_40 = arith.constant 0 : index
    %c15 = arith.constant 15 : index
    %44 = vector.load %arg3[%c0_40, %c15] : memref<128x16xf32, #tpu.memory_space<vmem>>, vector<128x1xf32>
    %c0_41 = arith.constant 0 : index
    %c14 = arith.constant 14 : index
    %45 = vector.load %arg2[%c0_41, %c14] : memref<128x16xf32, #tpu.memory_space<vmem>>, vector<128x1xf32>
    %46 = vector.broadcast %37 : f32 to vector<128x1xf32>
    %47 = arith.mulf %46, %45 : vector<128x1xf32>
    %48 = arith.addf %44, %47 : vector<128x1xf32>
    %c0_42 = arith.constant 0 : index
    %c15_43 = arith.constant 15 : index
    %49 = vector.load %arg3[%c0_42, %c15_43] : memref<128x16xf32, #tpu.memory_space<vmem>>, vector<128x1xf32>
    tpu.vector_store %arg3[%c0_42, %c15_43], %48 {strides = array<i32>} : memref<128x16xf32, #tpu.memory_space<vmem>>, vector<128x1xf32>,
    %c4 = arith.constant 4 : index
    %50 = memref.load %arg1[%c4] : memref<5xf32, #tpu.memory_space<smem>>
    %c0_44 = arith.constant 0 : index
    %c0_45 = arith.constant 0 : index
    %51 = vector.load %arg3[%c0_44, %c0_45] : memref<128x16xf32, #tpu.memory_space<vmem>>, vector<128x14xf32>
    %c0_46 = arith.constant 0 : index
    %c2_47 = arith.constant 2 : index
    %52 = vector.load %arg2[%c0_46, %c2_47] : memref<128x16xf32, #tpu.memory_space<vmem>>, vector<128x14xf32>
    %53 = vector.broadcast %50 : f32 to vector<128x14xf32>
    %54 = arith.mulf %53, %52 : vector<128x14xf32>
    %55 = arith.addf %51, %54 : vector<128x14xf32>
    %c0_48 = arith.constant 0 : index
    %c0_49 = arith.constant 0 : index
    %56 = vector.load %arg3[%c0_48, %c0_49] : memref<128x16xf32, #tpu.memory_space<vmem>>, vector<128x14xf32>
    tpu.vector_store %arg3[%c0_48, %c0_49], %55 {strides = array<i32>} : memref<128x16xf32, #tpu.memory_space<vmem>>, vector<128x14xf32>,
    %c0_50 = arith.constant 0 : index
    %c14_51 = arith.constant 14 : index
    %57 = vector.load %arg3[%c0_50, %c14_51] : memref<128x16xf32, #tpu.memory_space<vmem>>, vector<128x1xf32>
    %c0_52 = arith.constant 0 : index
    %c14_53 = arith.constant 14 : index
    %58 = vector.load %arg2[%c0_52, %c14_53] : memref<128x16xf32, #tpu.memory_space<vmem>>, vector<128x1xf32>
    %59 = vector.broadcast %50 : f32 to vector<128x1xf32>
    %60 = arith.mulf %59, %58 : vector<128x1xf32>
    %61 = arith.addf %57, %60 : vector<128x1xf32>
    %c0_54 = arith.constant 0 : index
    %c14_55 = arith.constant 14 : index
    %62 = vector.load %arg3[%c0_54, %c14_55] : memref<128x16xf32, #tpu.memory_space<vmem>>, vector<128x1xf32>
    tpu.vector_store %arg3[%c0_54, %c14_55], %61 {strides = array<i32>} : memref<128x16xf32, #tpu.memory_space<vmem>>, vector<128x1xf32>,
    %c0_56 = arith.constant 0 : index
    %c15_57 = arith.constant 15 : index
    %63 = vector.load %arg3[%c0_56, %c15_57] : memref<128x16xf32, #tpu.memory_space<vmem>>, vector<128x1xf32>
    %c0_58 = arith.constant 0 : index
    %c13 = arith.constant 13 : index
    %64 = vector.load %arg2[%c0_58, %c13] : memref<128x16xf32, #tpu.memory_space<vmem>>, vector<128x1xf32>
    %65 = vector.broadcast %50 : f32 to vector<128x1xf32>
    %66 = arith.mulf %65, %64 : vector<128x1xf32>
    %67 = arith.addf %63, %66 : vector<128x1xf32>
    %c0_59 = arith.constant 0 : index
    %c15_60 = arith.constant 15 : index
    %68 = vector.load %arg3[%c0_59, %c15_60] : memref<128x16xf32, #tpu.memory_space<vmem>>, vector<128x1xf32>
    tpu.vector_store %arg3[%c0_59, %c15_60], %67 {strides = array<i32>} : memref<128x16xf32, #tpu.memory_space<vmem>>, vector<128x1xf32>,
    return
  }
  func.func @transform_0(%arg0: i32) -> i32 {
    %c0_i32 = arith.constant 0 : i32
    %c0_i32_0 = arith.constant 0 : i32
    return %c0_i32 : i32
  }
  func.func @transform_1(%arg0: i32) -> (i32, i32) {
    %c0_i32 = arith.constant 0 : i32
    %c0_i32_0 = arith.constant 0 : i32
    return %arg0, %c0_i32 : i32, i32
  }
  func.func @transform_2(%arg0: i32) -> (i32, i32) {
    %c0_i32 = arith.constant 0 : i32
    %c0_i32_0 = arith.constant 0 : i32
    return %arg0, %c0_i32 : i32, i32
  }
}

</mosaic_0001>

<llo_original>
// kernel: tpu_custom_call.1
$region0: #{tpu_custom_call.1}
  #allocation0 [shape = 'u32[]', space=smem, size = 0x4, offset = 0x4, fixed_abs, tag = 'smem constant byte address 0x4 - core index']
  #allocation1 [shape = 'u32[144,128]{1,0:T(1,128)}', space=vmem, size = 0x12000, scoped, tag = 'internal scratch']
  %s0 = inlined_call_operand.vmem [shape: f32[5], index: 0, kind: input, shape index: {}]
  %s1 = inlined_call_operand.vmem [shape: f32[128,16], index: 1, kind: input, shape index: {}]
  %s2 = inlined_call_operand.vmem [shape: f32[128,16], index: 2, kind: output, shape index: {}]
  %s3 = sld [smem:[#allocation0]]
  $region22: #{tpu_custom_call.1} parent=0
    _
  %s5 = ssub.s32 1, %s3
  %s6 = scalar_select 0, %s5, %s3
  $region1: #{tpu_custom_call.1} parent=0
    #allocation2 [shape = 'u8[512]{0}', space=smem, size = 0x200, scoped, tag = 'input window, operand 0, single buffered']
    #allocation3 [shape = 's32[1]{0}', space=sflag, size = 0x4, scoped, tag = 'scoped memory for tpu_custom_call.1']
    %7 = vsyncpa [#allocation3], 0
    // Predicated region
    $region2: #{tpu_custom_call.1} parent=1 // pred_check
      _
    $region3: #{tpu_custom_call.1} parent=1 // pred_check_branch
      %9 = sbr.rel (0) target = $region5
    $region4: #{tpu_custom_call.1} parent=1 // pred_region
      %s11 = ssub.s32 16, 16
      %12 = vsyncadd [#allocation3], %s11
      %s14 = sshll.u32 %s0, 4
      %s15 = int_to_ptr.vmem [resolvable:$true] %s14
      %17 = dma.vmem_to_smem %s15, 16, [#allocation2], [#allocation3]
    $region5: #{tpu_custom_call.1} parent=1 // pred_fallthru
      _
    // Predicated region
    $region6: #{tpu_custom_call.1} parent=1 // pred_check
      _
    $region7: #{tpu_custom_call.1} parent=1 // pred_check_branch
      %19 = sbr.rel (0) target = $region9
    $region8: #{tpu_custom_call.1} parent=1 // pred_region
      _
    $region9: #{tpu_custom_call.1} parent=1 // pred_fallthru
      _
    // Predicated region
    $region10: #{tpu_custom_call.1} parent=1 // pred_check
      _
    $region11: #{tpu_custom_call.1} parent=1 // pred_check_branch
      %21 = sbr.rel (0) target = $region13
    $region12: #{tpu_custom_call.1} parent=1 // pred_region
      %22 = dma.done [#allocation3], 16
    $region13: #{tpu_custom_call.1} parent=1 // pred_fallthru
      _
    %23 = sfence
    %s24 = sld [smem:[#allocation2 + $0x2]]
    %v25 = vld [vmem:[%s1] sm:$0xff]
    %v26 = vld [vmem:[%s1 + $0x8] sm:$0xff]
    %v27 = vld [vmem:[%s1 + $0x10] sm:$0xff]
    %v28 = vld [vmem:[%s1 + $0x18] sm:$0xff]
    %v29 = vld [vmem:[%s1 + $0x20] sm:$0xff]
    %v30 = vld [vmem:[%s1 + $0x28] sm:$0xff]
    %v31 = vld [vmem:[%s1 + $0x30] sm:$0xff]
    %v32 = vld [vmem:[%s1 + $0x38] sm:$0xff]
    %v33 = vld [vmem:[%s1 + $0x40] sm:$0xff]
    %v34 = vld [vmem:[%s1 + $0x48] sm:$0xff]
    %v35 = vld [vmem:[%s1 + $0x50] sm:$0xff]
    %v36 = vld [vmem:[%s1 + $0x58] sm:$0xff]
    %v37 = vld [vmem:[%s1 + $0x60] sm:$0xff]
    %v38 = vld [vmem:[%s1 + $0x68] sm:$0xff]
    %v39 = vld [vmem:[%s1 + $0x70] sm:$0xff]
    %v40 = vld [vmem:[%s1 + $0x78] sm:$0xff]
    %v41 = vstv %s24
    %v42 = vmul.f32 %v41, %v25
    %v43 = vmul.f32 %v41, %v26
    %v44 = vmul.f32 %v41, %v27
    %v45 = vmul.f32 %v41, %v28
    %v46 = vmul.f32 %v41, %v29
    %v47 = vmul.f32 %v41, %v30
    %v48 = vmul.f32 %v41, %v31
    %v49 = vmul.f32 %v41, %v32
    %v50 = vmul.f32 %v41, %v33
    %v51 = vmul.f32 %v41, %v34
    %v52 = vmul.f32 %v41, %v35
    %v53 = vmul.f32 %v41, %v36
    %v54 = vmul.f32 %v41, %v37
    %v55 = vmul.f32 %v41, %v38
    %v56 = vmul.f32 %v41, %v39
    %v57 = vmul.f32 %v41, %v40
    %vm58 = vcmask 130048
    %59 = vst.msk [vmem:[%s2] sm:$0xff] %vm58, %v42
    %60 = vst.msk [vmem:[%s2 + $0x8] sm:$0xff] %vm58, %v43
    %61 = vst.msk [vmem:[%s2 + $0x10] sm:$0xff] %vm58, %v44
    %62 = vst.msk [vmem:[%s2 + $0x18] sm:$0xff] %vm58, %v45
    %63 = vst.msk [vmem:[%s2 + $0x20] sm:$0xff] %vm58, %v46
    %64 = vst.msk [vmem:[%s2 + $0x28] sm:$0xff] %vm58, %v47
    %65 = vst.msk [vmem:[%s2 + $0x30] sm:$0xff] %vm58, %v48
    %66 = vst.msk [vmem:[%s2 + $0x38] sm:$0xff] %vm58, %v49
    %67 = vst.msk [vmem:[%s2 + $0x40] sm:$0xff] %vm58, %v50
    %68 = vst.msk [vmem:[%s2 + $0x48] sm:$0xff] %vm58, %v51
    %69 = vst.msk [vmem:[%s2 + $0x50] sm:$0xff] %vm58, %v52
    %70 = vst.msk [vmem:[%s2 + $0x58] sm:$0xff] %vm58, %v53
    %71 = vst.msk [vmem:[%s2 + $0x60] sm:$0xff] %vm58, %v54
    %72 = vst.msk [vmem:[%s2 + $0x68] sm:$0xff] %vm58, %v55
    %73 = vst.msk [vmem:[%s2 + $0x70] sm:$0xff] %vm58, %v56
    %74 = vst.msk [vmem:[%s2 + $0x78] sm:$0xff] %vm58, %v57
    %s75 = sld [smem:[#allocation2]]
    %v76 = vld [vmem:[%s2] sm:$0xff]
    %v77 = vld [vmem:[%s2 + $0x8] sm:$0xff]
    %v78 = vld [vmem:[%s2 + $0x10] sm:$0xff]
    %v79 = vld [vmem:[%s2 + $0x18] sm:$0xff]
    %v80 = vld [vmem:[%s2 + $0x20] sm:$0xff]
    %v81 = vld [vmem:[%s2 + $0x28] sm:$0xff]
    %v82 = vld [vmem:[%s2 + $0x30] sm:$0xff]
    %v83 = vld [vmem:[%s2 + $0x38] sm:$0xff]
    %v84 = vld [vmem:[%s2 + $0x40] sm:$0xff]
    %v85 = vld [vmem:[%s2 + $0x48] sm:$0xff]
    %v86 = vld [vmem:[%s2 + $0x50] sm:$0xff]
    %v87 = vld [vmem:[%s2 + $0x58] sm:$0xff]
    %v88 = vld [vmem:[%s2 + $0x60] sm:$0xff]
    %v89 = vld [vmem:[%s2 + $0x68] sm:$0xff]
    %v90 = vld [vmem:[%s2 + $0x70] sm:$0xff]
    %v91 = vld [vmem:[%s2 + $0x78] sm:$0xff]
    %v92 = vld [vmem:[%s1] sm:$0xff]
    %v93 = vld [vmem:[%s1 + $0x8] sm:$0xff]
    %v94 = vld [vmem:[%s1 + $0x10] sm:$0xff]
    %v95 = vld [vmem:[%s1 + $0x18] sm:$0xff]
    %v96 = vld [vmem:[%s1 + $0x20] sm:$0xff]
    %v97 = vld [vmem:[%s1 + $0x28] sm:$0xff]
    %v98 = vld [vmem:[%s1 + $0x30] sm:$0xff]
    %v99 = vld [vmem:[%s1 + $0x38] sm:$0xff]
    %v100 = vld [vmem:[%s1 + $0x40] sm:$0xff]
    %v101 = vld [vmem:[%s1 + $0x48] sm:$0xff]
    %v102 = vld [vmem:[%s1 + $0x50] sm:$0xff]
    %v103 = vld [vmem:[%s1 + $0x58] sm:$0xff]
    %v104 = vld [vmem:[%s1 + $0x60] sm:$0xff]
    %v105 = vld [vmem:[%s1 + $0x68] sm:$0xff]
    %v106 = vld [vmem:[%s1 + $0x70] sm:$0xff]
    %v107 = vld [vmem:[%s1 + $0x78] sm:$0xff]
    %v108 = vstv %s75
    %v109 = vmul.f32 %v108, %v92
    %v110 = vmul.f32 %v108, %v93
    %v111 = vmul.f32 %v108, %v94
    %v112 = vmul.f32 %v108, %v95
    %v113 = vmul.f32 %v108, %v96
    %v114 = vmul.f32 %v108, %v97
    %v115 = vmul.f32 %v108, %v98
    %v116 = vmul.f32 %v108, %v99
    %v117 = vmul.f32 %v108, %v100
    %v118 = vmul.f32 %v108, %v101
    %v119 = vmul.f32 %v108, %v102
    %v120 = vmul.f32 %v108, %v103
    %v121 = vmul.f32 %v108, %v104
    %v122 = vmul.f32 %v108, %v105
    %v123 = vmul.f32 %v108, %v106
    %v124 = vmul.f32 %v108, %v107
    %141 = vrot.lane.b32.xlu0 %v109, 2
    %v142 = vpop.permute.xlu0 %141
    %143 = vrot.lane.b32.xlu0 %v110, 2
    %v144 = vpop.permute.xlu0 %143
    %145 = vrot.lane.b32.xlu0 %v111, 2
    %v146 = vpop.permute.xlu0 %145
    %147 = vrot.lane.b32.xlu0 %v112, 2
    %v148 = vpop.permute.xlu0 %147
    %149 = vrot.lane.b32.xlu0 %v113, 2
    %v150 = vpop.permute.xlu0 %149
    %151 = vrot.lane.b32.xlu0 %v114, 2
    %v152 = vpop.permute.xlu0 %151
    %153 = vrot.lane.b32.xlu0 %v115, 2
    %v154 = vpop.permute.xlu0 %153
    %155 = vrot.lane.b32.xlu0 %v116, 2
    %v156 = vpop.permute.xlu0 %155
    %157 = vrot.lane.b32.xlu0 %v117, 2
    %v158 = vpop.permute.xlu0 %157
    %159 = vrot.lane.b32.xlu0 %v118, 2
    %v160 = vpop.permute.xlu0 %159
    %161 = vrot.lane.b32.xlu0 %v119, 2
    %v162 = vpop.permute.xlu0 %161
    %163 = vrot.lane.b32.xlu0 %v120, 2
    %v164 = vpop.permute.xlu0 %163
    %165 = vrot.lane.b32.xlu0 %v121, 2
    %v166 = vpop.permute.xlu0 %165
    %167 = vrot.lane.b32.xlu0 %v122, 2
    %v168 = vpop.permute.xlu0 %167
    %169 = vrot.lane.b32.xlu0 %v123, 2
    %v170 = vpop.permute.xlu0 %169
    %171 = vrot.lane.b32.xlu0 %v124, 2
    %v172 = vpop.permute.xlu0 %171
    %v189 = vadd.f32 %v76, %v142
    %v190 = vadd.f32 %v77, %v144
    %v191 = vadd.f32 %v78, %v146
    %v192 = vadd.f32 %v79, %v148
    %v193 = vadd.f32 %v80, %v150
    %v194 = vadd.f32 %v81, %v152
    %v195 = vadd.f32 %v82, %v154
    %v196 = vadd.f32 %v83, %v156
    %v197 = vadd.f32 %v84, %v158
    %v198 = vadd.f32 %v85, %v160
    %v199 = vadd.f32 %v86, %v162
    %v200 = vadd.f32 %v87, %v164
    %v201 = vadd.f32 %v88, %v166
    %v202 = vadd.f32 %v89, %v168
    %v203 = vadd.f32 %v90, %v170
    %v204 = vadd.f32 %v91, %v172
    %vm205 = vcmask 130064
    %206 = vst.msk [vmem:[%s2] sm:$0xff] %vm205, %v189
    %207 = vst.msk [vmem:[%s2 + $0x8] sm:$0xff] %vm205, %v190
    %208 = vst.msk [vmem:[%s2 + $0x10] sm:$0xff] %vm205, %v191
    %209 = vst.msk [vmem:[%s2 + $0x18] sm:$0xff] %vm205, %v192
    %210 = vst.msk [vmem:[%s2 + $0x20] sm:$0xff] %vm205, %v193
    %211 = vst.msk [vmem:[%s2 + $0x28] sm:$0xff] %vm205, %v194
    %212 = vst.msk [vmem:[%s2 + $0x30] sm:$0xff] %vm205, %v195
    %213 = vst.msk [vmem:[%s2 + $0x38] sm:$0xff] %vm205, %v196
    %214 = vst.msk [vmem:[%s2 + $0x40] sm:$0xff] %vm205, %v197
    %215 = vst.msk [vmem:[%s2 + $0x48] sm:$0xff] %vm205, %v198
    %216 = vst.msk [vmem:[%s2 + $0x50] sm:$0xff] %vm205, %v199
    %217 = vst.msk [vmem:[%s2 + $0x58] sm:$0xff] %vm205, %v200
    %218 = vst.msk [vmem:[%s2 + $0x60] sm:$0xff] %vm205, %v201
    %219 = vst.msk [vmem:[%s2 + $0x68] sm:$0xff] %vm205, %v202
    %220 = vst.msk [vmem:[%s2 + $0x70] sm:$0xff] %vm205, %v203
    %221 = vst.msk [vmem:[%s2 + $0x78] sm:$0xff] %vm205, %v204
    %v222 = vld [vmem:[%s2] sm:$0xff]
    %v223 = vld [vmem:[%s2 + $0x8] sm:$0xff]
    %v224 = vld [vmem:[%s2 + $0x10] sm:$0xff]
    %v225 = vld [vmem:[%s2 + $0x18] sm:$0xff]
    %v226 = vld [vmem:[%s2 + $0x20] sm:$0xff]
    %v227 = vld [vmem:[%s2 + $0x28] sm:$0xff]
    %v228 = vld [vmem:[%s2 + $0x30] sm:$0xff]
    %v229 = vld [vmem:[%s2 + $0x38] sm:$0xff]
    %v230 = vld [vmem:[%s2 + $0x40] sm:$0xff]
    %v231 = vld [vmem:[%s2 + $0x48] sm:$0xff]
    %v232 = vld [vmem:[%s2 + $0x50] sm:$0xff]
    %v233 = vld [vmem:[%s2 + $0x58] sm:$0xff]
    %v234 = vld [vmem:[%s2 + $0x60] sm:$0xff]
    %v235 = vld [vmem:[%s2 + $0x68] sm:$0xff]
    %v236 = vld [vmem:[%s2 + $0x70] sm:$0xff]
    %v237 = vld [vmem:[%s2 + $0x78] sm:$0xff]
    %v238 = vld [vmem:[%s1] sm:$0xff]
    %v239 = vld [vmem:[%s1 + $0x8] sm:$0xff]
    %v240 = vld [vmem:[%s1 + $0x10] sm:$0xff]
    %v241 = vld [vmem:[%s1 + $0x18] sm:$0xff]
    %v242 = vld [vmem:[%s1 + $0x20] sm:$0xff]
    %v243 = vld [vmem:[%s1 + $0x28] sm:$0xff]
    %v244 = vld [vmem:[%s1 + $0x30] sm:$0xff]
    %v245 = vld [vmem:[%s1 + $0x38] sm:$0xff]
    %v246 = vld [vmem:[%s1 + $0x40] sm:$0xff]
    %v247 = vld [vmem:[%s1 + $0x48] sm:$0xff]
    %v248 = vld [vmem:[%s1 + $0x50] sm:$0xff]
    %v249 = vld [vmem:[%s1 + $0x58] sm:$0xff]
    %v250 = vld [vmem:[%s1 + $0x60] sm:$0xff]
    %v251 = vld [vmem:[%s1 + $0x68] sm:$0xff]
    %v252 = vld [vmem:[%s1 + $0x70] sm:$0xff]
    %v253 = vld [vmem:[%s1 + $0x78] sm:$0xff]
    %v254 = vmul.f32 %v108, %v238
    %v255 = vmul.f32 %v108, %v239
    %v256 = vmul.f32 %v108, %v240
    %v257 = vmul.f32 %v108, %v241
    %v258 = vmul.f32 %v108, %v242
    %v259 = vmul.f32 %v108, %v243
    %v260 = vmul.f32 %v108, %v244
    %v261 = vmul.f32 %v108, %v245
    %v262 = vmul.f32 %v108, %v246
    %v263 = vmul.f32 %v108, %v247
    %v264 = vmul.f32 %v108, %v248
    %v265 = vmul.f32 %v108, %v249
    %v266 = vmul.f32 %v108, %v250
    %v267 = vmul.f32 %v108, %v251
    %v268 = vmul.f32 %v108, %v252
    %v269 = vmul.f32 %v108, %v253
    %286 = vrot.lane.b32.xlu0 %v254, 126
    %v287 = vpop.permute.xlu0 %286
    %288 = vrot.lane.b32.xlu0 %v255, 126
    %v289 = vpop.permute.xlu0 %288
    %290 = vrot.lane.b32.xlu0 %v256, 126
    %v291 = vpop.permute.xlu0 %290
    %292 = vrot.lane.b32.xlu0 %v257, 126
    %v293 = vpop.permute.xlu0 %292
    %294 = vrot.lane.b32.xlu0 %v258, 126
    %v295 = vpop.permute.xlu0 %294
    %296 = vrot.lane.b32.xlu0 %v259, 126
    %v297 = vpop.permute.xlu0 %296
    %298 = vrot.lane.b32.xlu0 %v260, 126
    %v299 = vpop.permute.xlu0 %298
    %300 = vrot.lane.b32.xlu0 %v261, 126
    %v301 = vpop.permute.xlu0 %300
    %302 = vrot.lane.b32.xlu0 %v262, 126
    %v303 = vpop.permute.xlu0 %302
    %304 = vrot.lane.b32.xlu0 %v263, 126
    %v305 = vpop.permute.xlu0 %304
    %306 = vrot.lane.b32.xlu0 %v264, 126
    %v307 = vpop.permute.xlu0 %306
    %308 = vrot.lane.b32.xlu0 %v265, 126
    %v309 = vpop.permute.xlu0 %308
    %310 = vrot.lane.b32.xlu0 %v266, 126
    %v311 = vpop.permute.xlu0 %310
    %312 = vrot.lane.b32.xlu0 %v267, 126
    %v313 = vpop.permute.xlu0 %312
    %314 = vrot.lane.b32.xlu0 %v268, 126
    %v315 = vpop.permute.xlu0 %314
    %316 = vrot.lane.b32.xlu0 %v269, 126
    %v317 = vpop.permute.xlu0 %316
    %v334 = vadd.f32 %v222, %v287
    %v335 = vadd.f32 %v223, %v289
    %v336 = vadd.f32 %v224, %v291
    %v337 = vadd.f32 %v225, %v293
    %v338 = vadd.f32 %v226, %v295
    %v339 = vadd.f32 %v227, %v297
    %v340 = vadd.f32 %v228, %v299
    %v341 = vadd.f32 %v229, %v301
    %v342 = vadd.f32 %v230, %v303
    %v343 = vadd.f32 %v231, %v305
    %v344 = vadd.f32 %v232, %v307
    %v345 = vadd.f32 %v233, %v309
    %v346 = vadd.f32 %v234, %v311
    %v347 = vadd.f32 %v235, %v313
    %v348 = vadd.f32 %v236, %v315
    %v349 = vadd.f32 %v237, %v317
    %vm350 = vcmask 7168
    %351 = vst.msk [vmem:[%s2] sm:$0xff] %vm350, %v334
    %352 = vst.msk [vmem:[%s2 + $0x8] sm:$0xff] %vm350, %v335
    %353 = vst.msk [vmem:[%s2 + $0x10] sm:$0xff] %vm350, %v336
    %354 = vst.msk [vmem:[%s2 + $0x18] sm:$0xff] %vm350, %v337
    %355 = vst.msk [vmem:[%s2 + $0x20] sm:$0xff] %vm350, %v338
    %356 = vst.msk [vmem:[%s2 + $0x28] sm:$0xff] %vm350, %v339
    %357 = vst.msk [vmem:[%s2 + $0x30] sm:$0xff] %vm350, %v340
    %358 = vst.msk [vmem:[%s2 + $0x38] sm:$0xff] %vm350, %v341
    %359 = vst.msk [vmem:[%s2 + $0x40] sm:$0xff] %vm350, %v342
    %360 = vst.msk [vmem:[%s2 + $0x48] sm:$0xff] %vm350, %v343
    %361 = vst.msk [vmem:[%s2 + $0x50] sm:$0xff] %vm350, %v344
    %362 = vst.msk [vmem:[%s2 + $0x58] sm:$0xff] %vm350, %v345
    %363 = vst.msk [vmem:[%s2 + $0x60] sm:$0xff] %vm350, %v346
    %364 = vst.msk [vmem:[%s2 + $0x68] sm:$0xff] %vm350, %v347
    %365 = vst.msk [vmem:[%s2 + $0x70] sm:$0xff] %vm350, %v348
    %366 = vst.msk [vmem:[%s2 + $0x78] sm:$0xff] %vm350, %v349
    %v367 = vld [vmem:[%s2] sm:$0xff]
    %v368 = vld [vmem:[%s2 + $0x8] sm:$0xff]
    %v369 = vld [vmem:[%s2 + $0x10] sm:$0xff]
    %v370 = vld [vmem:[%s2 + $0x18] sm:$0xff]
    %v371 = vld [vmem:[%s2 + $0x20] sm:$0xff]
    %v372 = vld [vmem:[%s2 + $0x28] sm:$0xff]
    %v373 = vld [vmem:[%s2 + $0x30] sm:$0xff]
    %v374 = vld [vmem:[%s2 + $0x38] sm:$0xff]
    %v375 = vld [vmem:[%s2 + $0x40] sm:$0xff]
    %v376 = vld [vmem:[%s2 + $0x48] sm:$0xff]
    %v377 = vld [vmem:[%s2 + $0x50] sm:$0xff]
    %v378 = vld [vmem:[%s2 + $0x58] sm:$0xff]
    %v379 = vld [vmem:[%s2 + $0x60] sm:$0xff]
    %v380 = vld [vmem:[%s2 + $0x68] sm:$0xff]
    %v381 = vld [vmem:[%s2 + $0x70] sm:$0xff]
    %v382 = vld [vmem:[%s2 + $0x78] sm:$0xff]
    %v383 = vld [vmem:[%s1] sm:$0xff]
    %v384 = vld [vmem:[%s1 + $0x8] sm:$0xff]
    %v385 = vld [vmem:[%s1 + $0x10] sm:$0xff]
    %v386 = vld [vmem:[%s1 + $0x18] sm:$0xff]
    %v387 = vld [vmem:[%s1 + $0x20] sm:$0xff]
    %v388 = vld [vmem:[%s1 + $0x28] sm:$0xff]
    %v389 = vld [vmem:[%s1 + $0x30] sm:$0xff]
    %v390 = vld [vmem:[%s1 + $0x38] sm:$0xff]
    %v391 = vld [vmem:[%s1 + $0x40] sm:$0xff]
    %v392 = vld [vmem:[%s1 + $0x48] sm:$0xff]
    %v393 = vld [vmem:[%s1 + $0x50] sm:$0xff]
    %v394 = vld [vmem:[%s1 + $0x58] sm:$0xff]
    %v395 = vld [vmem:[%s1 + $0x60] sm:$0xff]
    %v396 = vld [vmem:[%s1 + $0x68] sm:$0xff]
    %v397 = vld [vmem:[%s1 + $0x70] sm:$0xff]
    %v398 = vld [vmem:[%s1 + $0x78] sm:$0xff]
    %v399 = vmul.f32 %v108, %v383
    %v400 = vmul.f32 %v108, %v384
    %v401 = vmul.f32 %v108, %v385
    %v402 = vmul.f32 %v108, %v386
    %v403 = vmul.f32 %v108, %v387
    %v404 = vmul.f32 %v108, %v388
    %v405 = vmul.f32 %v108, %v389
    %v406 = vmul.f32 %v108, %v390
    %v407 = vmul.f32 %v108, %v391
    %v408 = vmul.f32 %v108, %v392
    %v409 = vmul.f32 %v108, %v393
    %v410 = vmul.f32 %v108, %v394
    %v411 = vmul.f32 %v108, %v395
    %v412 = vmul.f32 %v108, %v396
    %v413 = vmul.f32 %v108, %v397
    %v414 = vmul.f32 %v108, %v398
    %v415 = vadd.f32 %v367, %v399
    %v416 = vadd.f32 %v368, %v400
    %v417 = vadd.f32 %v369, %v401
    %v418 = vadd.f32 %v370, %v402
    %v419 = vadd.f32 %v371, %v403
    %v420 = vadd.f32 %v372, %v404
    %v421 = vadd.f32 %v373, %v405
    %v422 = vadd.f32 %v374, %v406
    %v423 = vadd.f32 %v375, %v407
    %v424 = vadd.f32 %v376, %v408
    %v425 = vadd.f32 %v377, %v409
    %v426 = vadd.f32 %v378, %v410
    %v427 = vadd.f32 %v379, %v411
    %v428 = vadd.f32 %v380, %v412
    %v429 = vadd.f32 %v381, %v413
    %v430 = vadd.f32 %v382, %v414
    %vm431 = vcmask 15368
    %432 = vst.msk [vmem:[%s2] sm:$0xff] %vm431, %v415
    %433 = vst.msk [vmem:[%s2 + $0x8] sm:$0xff] %vm431, %v416
    %434 = vst.msk [vmem:[%s2 + $0x10] sm:$0xff] %vm431, %v417
    %435 = vst.msk [vmem:[%s2 + $0x18] sm:$0xff] %vm431, %v418
    %436 = vst.msk [vmem:[%s2 + $0x20] sm:$0xff] %vm431, %v419
    %437 = vst.msk [vmem:[%s2 + $0x28] sm:$0xff] %vm431, %v420
    %438 = vst.msk [vmem:[%s2 + $0x30] sm:$0xff] %vm431, %v421
    %439 = vst.msk [vmem:[%s2 + $0x38] sm:$0xff] %vm431, %v422
    %440 = vst.msk [vmem:[%s2 + $0x40] sm:$0xff] %vm431, %v423
    %441 = vst.msk [vmem:[%s2 + $0x48] sm:$0xff] %vm431, %v424
    %442 = vst.msk [vmem:[%s2 + $0x50] sm:$0xff] %vm431, %v425
    %443 = vst.msk [vmem:[%s2 + $0x58] sm:$0xff] %vm431, %v426
    %444 = vst.msk [vmem:[%s2 + $0x60] sm:$0xff] %vm431, %v427
    %445 = vst.msk [vmem:[%s2 + $0x68] sm:$0xff] %vm431, %v428
    %446 = vst.msk [vmem:[%s2 + $0x70] sm:$0xff] %vm431, %v429
    %447 = vst.msk [vmem:[%s2 + $0x78] sm:$0xff] %vm431, %v430
    %s448 = sld [smem:[#allocation2 + $0x1]]
    %v449 = vld [vmem:[%s2] sm:$0xff]
    %v450 = vld [vmem:[%s2 + $0x8] sm:$0xff]
    %v451 = vld [vmem:[%s2 + $0x10] sm:$0xff]
    %v452 = vld [vmem:[%s2 + $0x18] sm:$0xff]
    %v453 = vld [vmem:[%s2 + $0x20] sm:$0xff]
    %v454 = vld [vmem:[%s2 + $0x28] sm:$0xff]
    %v455 = vld [vmem:[%s2 + $0x30] sm:$0xff]
    %v456 = vld [vmem:[%s2 + $0x38] sm:$0xff]
    %v457 = vld [vmem:[%s2 + $0x40] sm:$0xff]
    %v458 = vld [vmem:[%s2 + $0x48] sm:$0xff]
    %v459 = vld [vmem:[%s2 + $0x50] sm:$0xff]
    %v460 = vld [vmem:[%s2 + $0x58] sm:$0xff]
    %v461 = vld [vmem:[%s2 + $0x60] sm:$0xff]
    %v462 = vld [vmem:[%s2 + $0x68] sm:$0xff]
    %v463 = vld [vmem:[%s2 + $0x70] sm:$0xff]
    %v464 = vld [vmem:[%s2 + $0x78] sm:$0xff]
    %v465 = vld [vmem:[%s1] sm:$0xff]
    %v466 = vld [vmem:[%s1 + $0x8] sm:$0xff]
    %v467 = vld [vmem:[%s1 + $0x10] sm:$0xff]
    %v468 = vld [vmem:[%s1 + $0x18] sm:$0xff]
    %v469 = vld [vmem:[%s1 + $0x20] sm:$0xff]
    %v470 = vld [vmem:[%s1 + $0x28] sm:$0xff]
    %v471 = vld [vmem:[%s1 + $0x30] sm:$0xff]
    %v472 = vld [vmem:[%s1 + $0x38] sm:$0xff]
    %v473 = vld [vmem:[%s1 + $0x40] sm:$0xff]
    %v474 = vld [vmem:[%s1 + $0x48] sm:$0xff]
    %v475 = vld [vmem:[%s1 + $0x50] sm:$0xff]
    %v476 = vld [vmem:[%s1 + $0x58] sm:$0xff]
    %v477 = vld [vmem:[%s1 + $0x60] sm:$0xff]
    %v478 = vld [vmem:[%s1 + $0x68] sm:$0xff]
    %v479 = vld [vmem:[%s1 + $0x70] sm:$0xff]
    %v480 = vld [vmem:[%s1 + $0x78] sm:$0xff]
    %v481 = vstv %s448
    %v482 = vmul.f32 %v481, %v465
    %v483 = vmul.f32 %v481, %v466
    %v484 = vmul.f32 %v481, %v467
    %v485 = vmul.f32 %v481, %v468
    %v486 = vmul.f32 %v481, %v469
    %v487 = vmul.f32 %v481, %v470
    %v488 = vmul.f32 %v481, %v471
    %v489 = vmul.f32 %v481, %v472
    %v490 = vmul.f32 %v481, %v473
    %v491 = vmul.f32 %v481, %v474
    %v492 = vmul.f32 %v481, %v475
    %v493 = vmul.f32 %v481, %v476
    %v494 = vmul.f32 %v481, %v477
    %v495 = vmul.f32 %v481, %v478
    %v496 = vmul.f32 %v481, %v479
    %v497 = vmul.f32 %v481, %v480
    %514 = vrot.lane.b32.xlu0 %v482, 1
    %v515 = vpop.permute.xlu0 %514
    %516 = vrot.lane.b32.xlu0 %v483, 1
    %v517 = vpop.permute.xlu0 %516
    %518 = vrot.lane.b32.xlu0 %v484, 1
    %v519 = vpop.permute.xlu0 %518
    %520 = vrot.lane.b32.xlu0 %v485, 1
    %v521 = vpop.permute.xlu0 %520
    %522 = vrot.lane.b32.xlu0 %v486, 1
    %v523 = vpop.permute.xlu0 %522
    %524 = vrot.lane.b32.xlu0 %v487, 1
    %v525 = vpop.permute.xlu0 %524
    %526 = vrot.lane.b32.xlu0 %v488, 1
    %v527 = vpop.permute.xlu0 %526
    %528 = vrot.lane.b32.xlu0 %v489, 1
    %v529 = vpop.permute.xlu0 %528
    %530 = vrot.lane.b32.xlu0 %v490, 1
    %v531 = vpop.permute.xlu0 %530
    %532 = vrot.lane.b32.xlu0 %v491, 1
    %v533 = vpop.permute.xlu0 %532
    %534 = vrot.lane.b32.xlu0 %v492, 1
    %v535 = vpop.permute.xlu0 %534
    %536 = vrot.lane.b32.xlu0 %v493, 1
    %v537 = vpop.permute.xlu0 %536
    %538 = vrot.lane.b32.xlu0 %v494, 1
    %v539 = vpop.permute.xlu0 %538
    %540 = vrot.lane.b32.xlu0 %v495, 1
    %v541 = vpop.permute.xlu0 %540
    %542 = vrot.lane.b32.xlu0 %v496, 1
    %v543 = vpop.permute.xlu0 %542
    %544 = vrot.lane.b32.xlu0 %v497, 1
    %v545 = vpop.permute.xlu0 %544
    %v562 = vadd.f32 %v449, %v515
    %v563 = vadd.f32 %v450, %v517
    %v564 = vadd.f32 %v451, %v519
    %v565 = vadd.f32 %v452, %v521
    %v566 = vadd.f32 %v453, %v523
    %v567 = vadd.f32 %v454, %v525
    %v568 = vadd.f32 %v455, %v527
    %v569 = vadd.f32 %v456, %v529
    %v570 = vadd.f32 %v457, %v531
    %v571 = vadd.f32 %v458, %v533
    %v572 = vadd.f32 %v459, %v535
    %v573 = vadd.f32 %v460, %v537
    %v574 = vadd.f32 %v461, %v539
    %v575 = vadd.f32 %v462, %v541
    %v576 = vadd.f32 %v463, %v543
    %v577 = vadd.f32 %v464, %v545
    %vm578 = vcmask 130056
    %579 = vst.msk [vmem:[%s2] sm:$0xff] %vm578, %v562
    %580 = vst.msk [vmem:[%s2 + $0x8] sm:$0xff] %vm578, %v563
    %581 = vst.msk [vmem:[%s2 + $0x10] sm:$0xff] %vm578, %v564
    %582 = vst.msk [vmem:[%s2 + $0x18] sm:$0xff] %vm578, %v565
    %583 = vst.msk [vmem:[%s2 + $0x20] sm:$0xff] %vm578, %v566
    %584 = vst.msk [vmem:[%s2 + $0x28] sm:$0xff] %vm578, %v567
    %585 = vst.msk [vmem:[%s2 + $0x30] sm:$0xff] %vm578, %v568
    %586 = vst.msk [vmem:[%s2 + $0x38] sm:$0xff] %vm578, %v569
    %587 = vst.msk [vmem:[%s2 + $0x40] sm:$0xff] %vm578, %v570
    %588 = vst.msk [vmem:[%s2 + $0x48] sm:$0xff] %vm578, %v571
    %589 = vst.msk [vmem:[%s2 + $0x50] sm:$0xff] %vm578, %v572
    %590 = vst.msk [vmem:[%s2 + $0x58] sm:$0xff] %vm578, %v573
    %591 = vst.msk [vmem:[%s2 + $0x60] sm:$0xff] %vm578, %v574
    %592 = vst.msk [vmem:[%s2 + $0x68] sm:$0xff] %vm578, %v575
    %593 = vst.msk [vmem:[%s2 + $0x70] sm:$0xff] %vm578, %v576
    %594 = vst.msk [vmem:[%s2 + $0x78] sm:$0xff] %vm578, %v577
    %v595 = vld [vmem:[%s2] sm:$0xff]
    %v596 = vld [vmem:[%s2 + $0x8] sm:$0xff]
    %v597 = vld [vmem:[%s2 + $0x10] sm:$0xff]
    %v598 = vld [vmem:[%s2 + $0x18] sm:$0xff]
    %v599 = vld [vmem:[%s2 + $0x20] sm:$0xff]
    %v600 = vld [vmem:[%s2 + $0x28] sm:$0xff]
    %v601 = vld [vmem:[%s2 + $0x30] sm:$0xff]
    %v602 = vld [vmem:[%s2 + $0x38] sm:$0xff]
    %v603 = vld [vmem:[%s2 + $0x40] sm:$0xff]
    %v604 = vld [vmem:[%s2 + $0x48] sm:$0xff]
    %v605 = vld [vmem:[%s2 + $0x50] sm:$0xff]
    %v606 = vld [vmem:[%s2 + $0x58] sm:$0xff]
    %v607 = vld [vmem:[%s2 + $0x60] sm:$0xff]
    %v608 = vld [vmem:[%s2 + $0x68] sm:$0xff]
    %v609 = vld [vmem:[%s2 + $0x70] sm:$0xff]
    %v610 = vld [vmem:[%s2 + $0x78] sm:$0xff]
    %v611 = vld [vmem:[%s1] sm:$0xff]
    %v612 = vld [vmem:[%s1 + $0x8] sm:$0xff]
    %v613 = vld [vmem:[%s1 + $0x10] sm:$0xff]
    %v614 = vld [vmem:[%s1 + $0x18] sm:$0xff]
    %v615 = vld [vmem:[%s1 + $0x20] sm:$0xff]
    %v616 = vld [vmem:[%s1 + $0x28] sm:$0xff]
    %v617 = vld [vmem:[%s1 + $0x30] sm:$0xff]
    %v618 = vld [vmem:[%s1 + $0x38] sm:$0xff]
    %v619 = vld [vmem:[%s1 + $0x40] sm:$0xff]
    %v620 = vld [vmem:[%s1 + $0x48] sm:$0xff]
    %v621 = vld [vmem:[%s1 + $0x50] sm:$0xff]
    %v622 = vld [vmem:[%s1 + $0x58] sm:$0xff]
    %v623 = vld [vmem:[%s1 + $0x60] sm:$0xff]
    %v624 = vld [vmem:[%s1 + $0x68] sm:$0xff]
    %v625 = vld [vmem:[%s1 + $0x70] sm:$0xff]
    %v626 = vld [vmem:[%s1 + $0x78] sm:$0xff]
    %v627 = vmul.f32 %v481, %v611
    %v628 = vmul.f32 %v481, %v612
    %v629 = vmul.f32 %v481, %v613
    %v630 = vmul.f32 %v481, %v614
    %v631 = vmul.f32 %v481, %v615
    %v632 = vmul.f32 %v481, %v616
    %v633 = vmul.f32 %v481, %v617
    %v634 = vmul.f32 %v481, %v618
    %v635 = vmul.f32 %v481, %v619
    %v636 = vmul.f32 %v481, %v620
    %v637 = vmul.f32 %v481, %v621
    %v638 = vmul.f32 %v481, %v622
    %v639 = vmul.f32 %v481, %v623
    %v640 = vmul.f32 %v481, %v624
    %v641 = vmul.f32 %v481, %v625
    %v642 = vmul.f32 %v481, %v626
    %659 = vrot.lane.b32.xlu0 %v627, 127
    %v660 = vpop.permute.xlu0 %659
    %661 = vrot.lane.b32.xlu0 %v628, 127
    %v662 = vpop.permute.xlu0 %661
    %663 = vrot.lane.b32.xlu0 %v629, 127
    %v664 = vpop.permute.xlu0 %663
    %665 = vrot.lane.b32.xlu0 %v630, 127
    %v666 = vpop.permute.xlu0 %665
    %667 = vrot.lane.b32.xlu0 %v631, 127
    %v668 = vpop.permute.xlu0 %667
    %669 = vrot.lane.b32.xlu0 %v632, 127
    %v670 = vpop.permute.xlu0 %669
    %671 = vrot.lane.b32.xlu0 %v633, 127
    %v672 = vpop.permute.xlu0 %671
    %673 = vrot.lane.b32.xlu0 %v634, 127
    %v674 = vpop.permute.xlu0 %673
    %675 = vrot.lane.b32.xlu0 %v635, 127
    %v676 = vpop.permute.xlu0 %675
    %677 = vrot.lane.b32.xlu0 %v636, 127
    %v678 = vpop.permute.xlu0 %677
    %679 = vrot.lane.b32.xlu0 %v637, 127
    %v680 = vpop.permute.xlu0 %679
    %681 = vrot.lane.b32.xlu0 %v638, 127
    %v682 = vpop.permute.xlu0 %681
    %683 = vrot.lane.b32.xlu0 %v639, 127
    %v684 = vpop.permute.xlu0 %683
    %685 = vrot.lane.b32.xlu0 %v640, 127
    %v686 = vpop.permute.xlu0 %685
    %687 = vrot.lane.b32.xlu0 %v641, 127
    %v688 = vpop.permute.xlu0 %687
    %689 = vrot.lane.b32.xlu0 %v642, 127
    %v690 = vpop.permute.xlu0 %689
    %v707 = vadd.f32 %v595, %v660
    %v708 = vadd.f32 %v596, %v662
    %v709 = vadd.f32 %v597, %v664
    %v710 = vadd.f32 %v598, %v666
    %v711 = vadd.f32 %v599, %v668
    %v712 = vadd.f32 %v600, %v670
    %v713 = vadd.f32 %v601, %v672
    %v714 = vadd.f32 %v602, %v674
    %v715 = vadd.f32 %v603, %v676
    %v716 = vadd.f32 %v604, %v678
    %v717 = vadd.f32 %v605, %v680
    %v718 = vadd.f32 %v606, %v682
    %v719 = vadd.f32 %v607, %v684
    %v720 = vadd.f32 %v608, %v686
    %v721 = vadd.f32 %v609, %v688
    %v722 = vadd.f32 %v610, %v690
    %723 = vst.msk [vmem:[%s2] sm:$0xff] %vm350, %v707
    %724 = vst.msk [vmem:[%s2 + $0x8] sm:$0xff] %vm350, %v708
    %725 = vst.msk [vmem:[%s2 + $0x10] sm:$0xff] %vm350, %v709
    %726 = vst.msk [vmem:[%s2 + $0x18] sm:$0xff] %vm350, %v710
    %727 = vst.msk [vmem:[%s2 + $0x20] sm:$0xff] %vm350, %v711
    %728 = vst.msk [vmem:[%s2 + $0x28] sm:$0xff] %vm350, %v712
    %729 = vst.msk [vmem:[%s2 + $0x30] sm:$0xff] %vm350, %v713
    %730 = vst.msk [vmem:[%s2 + $0x38] sm:$0xff] %vm350, %v714
    %731 = vst.msk [vmem:[%s2 + $0x40] sm:$0xff] %vm350, %v715
    %732 = vst.msk [vmem:[%s2 + $0x48] sm:$0xff] %vm350, %v716
    %733 = vst.msk [vmem:[%s2 + $0x50] sm:$0xff] %vm350, %v717
    %734 = vst.msk [vmem:[%s2 + $0x58] sm:$0xff] %vm350, %v718
    %735 = vst.msk [vmem:[%s2 + $0x60] sm:$0xff] %vm350, %v719
    %736 = vst.msk [vmem:[%s2 + $0x68] sm:$0xff] %vm350, %v720
    %737 = vst.msk [vmem:[%s2 + $0x70] sm:$0xff] %vm350, %v721
    %738 = vst.msk [vmem:[%s2 + $0x78] sm:$0xff] %vm350, %v722
    %s739 = sld [smem:[#allocation2 + $0x3]]
    %v740 = vld [vmem:[%s2] sm:$0xff]
    %v741 = vld [vmem:[%s2 + $0x8] sm:$0xff]
    %v742 = vld [vmem:[%s2 + $0x10] sm:$0xff]
    %v743 = vld [vmem:[%s2 + $0x18] sm:$0xff]
    %v744 = vld [vmem:[%s2 + $0x20] sm:$0xff]
    %v745 = vld [vmem:[%s2 + $0x28] sm:$0xff]
    %v746 = vld [vmem:[%s2 + $0x30] sm:$0xff]
    %v747 = vld [vmem:[%s2 + $0x38] sm:$0xff]
    %v748 = vld [vmem:[%s2 + $0x40] sm:$0xff]
    %v749 = vld [vmem:[%s2 + $0x48] sm:$0xff]
    %v750 = vld [vmem:[%s2 + $0x50] sm:$0xff]
    %v751 = vld [vmem:[%s2 + $0x58] sm:$0xff]
    %v752 = vld [vmem:[%s2 + $0x60] sm:$0xff]
    %v753 = vld [vmem:[%s2 + $0x68] sm:$0xff]
    %v754 = vld [vmem:[%s2 + $0x70] sm:$0xff]
    %v755 = vld [vmem:[%s2 + $0x78] sm:$0xff]
    %v756 = vld [vmem:[%s1] sm:$0xff]
    %v757 = vld [vmem:[%s1 + $0x8] sm:$0xff]
    %v758 = vld [vmem:[%s1 + $0x10] sm:$0xff]
    %v759 = vld [vmem:[%s1 + $0x18] sm:$0xff]
    %v760 = vld [vmem:[%s1 + $0x20] sm:$0xff]
    %v761 = vld [vmem:[%s1 + $0x28] sm:$0xff]
    %v762 = vld [vmem:[%s1 + $0x30] sm:$0xff]
    %v763 = vld [vmem:[%s1 + $0x38] sm:$0xff]
    %v764 = vld [vmem:[%s1 + $0x40] sm:$0xff]
    %v765 = vld [vmem:[%s1 + $0x48] sm:$0xff]
    %v766 = vld [vmem:[%s1 + $0x50] sm:$0xff]
    %v767 = vld [vmem:[%s1 + $0x58] sm:$0xff]
    %v768 = vld [vmem:[%s1 + $0x60] sm:$0xff]
    %v769 = vld [vmem:[%s1 + $0x68] sm:$0xff]
    %v770 = vld [vmem:[%s1 + $0x70] sm:$0xff]
    %v771 = vld [vmem:[%s1 + $0x78] sm:$0xff]
    %v772 = vstv %s739
    %v773 = vmul.f32 %v772, %v756
    %v774 = vmul.f32 %v772, %v757
    %v775 = vmul.f32 %v772, %v758
    %v776 = vmul.f32 %v772, %v759
    %v777 = vmul.f32 %v772, %v760
    %v778 = vmul.f32 %v772, %v761
    %v779 = vmul.f32 %v772, %v762
    %v780 = vmul.f32 %v772, %v763
    %v781 = vmul.f32 %v772, %v764
    %v782 = vmul.f32 %v772, %v765
    %v783 = vmul.f32 %v772, %v766
    %v784 = vmul.f32 %v772, %v767
    %v785 = vmul.f32 %v772, %v768
    %v786 = vmul.f32 %v772, %v769
    %v787 = vmul.f32 %v772, %v770
    %v788 = vmul.f32 %v772, %v771
    %805 = vrot.lane.b32.xlu0 %v773, 127
    %v806 = vpop.permute.xlu0 %805
    %807 = vrot.lane.b32.xlu0 %v774, 127
    %v808 = vpop.permute.xlu0 %807
    %809 = vrot.lane.b32.xlu0 %v775, 127
    %v810 = vpop.permute.xlu0 %809
    %811 = vrot.lane.b32.xlu0 %v776, 127
    %v812 = vpop.permute.xlu0 %811
    %813 = vrot.lane.b32.xlu0 %v777, 127
    %v814 = vpop.permute.xlu0 %813
    %815 = vrot.lane.b32.xlu0 %v778, 127
    %v816 = vpop.permute.xlu0 %815
    %817 = vrot.lane.b32.xlu0 %v779, 127
    %v818 = vpop.permute.xlu0 %817
    %819 = vrot.lane.b32.xlu0 %v780, 127
    %v820 = vpop.permute.xlu0 %819
    %821 = vrot.lane.b32.xlu0 %v781, 127
    %v822 = vpop.permute.xlu0 %821
    %823 = vrot.lane.b32.xlu0 %v782, 127
    %v824 = vpop.permute.xlu0 %823
    %825 = vrot.lane.b32.xlu0 %v783, 127
    %v826 = vpop.permute.xlu0 %825
    %827 = vrot.lane.b32.xlu0 %v784, 127
    %v828 = vpop.permute.xlu0 %827
    %829 = vrot.lane.b32.xlu0 %v785, 127
    %v830 = vpop.permute.xlu0 %829
    %831 = vrot.lane.b32.xlu0 %v786, 127
    %v832 = vpop.permute.xlu0 %831
    %833 = vrot.lane.b32.xlu0 %v787, 127
    %v834 = vpop.permute.xlu0 %833
    %835 = vrot.lane.b32.xlu0 %v788, 127
    %v836 = vpop.permute.xlu0 %835
    %v853 = vadd.f32 %v740, %v806
    %v854 = vadd.f32 %v741, %v808
    %v855 = vadd.f32 %v742, %v810
    %v856 = vadd.f32 %v743, %v812
    %v857 = vadd.f32 %v744, %v814
    %v858 = vadd.f32 %v745, %v816
    %v859 = vadd.f32 %v746, %v818
    %v860 = vadd.f32 %v747, %v820
    %v861 = vadd.f32 %v748, %v822
    %v862 = vadd.f32 %v749, %v824
    %v863 = vadd.f32 %v750, %v826
    %v864 = vadd.f32 %v751, %v828
    %v865 = vadd.f32 %v752, %v830
    %v866 = vadd.f32 %v753, %v832
    %v867 = vadd.f32 %v754, %v834
    %v868 = vadd.f32 %v755, %v836
    %vm869 = vcmask 121856
    %870 = vst.msk [vmem:[%s2] sm:$0xff] %vm869, %v853
    %871 = vst.msk [vmem:[%s2 + $0x8] sm:$0xff] %vm869, %v854
    %872 = vst.msk [vmem:[%s2 + $0x10] sm:$0xff] %vm869, %v855
    %873 = vst.msk [vmem:[%s2 + $0x18] sm:$0xff] %vm869, %v856
    %874 = vst.msk [vmem:[%s2 + $0x20] sm:$0xff] %vm869, %v857
    %875 = vst.msk [vmem:[%s2 + $0x28] sm:$0xff] %vm869, %v858
    %876 = vst.msk [vmem:[%s2 + $0x30] sm:$0xff] %vm869, %v859
    %877 = vst.msk [vmem:[%s2 + $0x38] sm:$0xff] %vm869, %v860
    %878 = vst.msk [vmem:[%s2 + $0x40] sm:$0xff] %vm869, %v861
    %879 = vst.msk [vmem:[%s2 + $0x48] sm:$0xff] %vm869, %v862
    %880 = vst.msk [vmem:[%s2 + $0x50] sm:$0xff] %vm869, %v863
    %881 = vst.msk [vmem:[%s2 + $0x58] sm:$0xff] %vm869, %v864
    %882 = vst.msk [vmem:[%s2 + $0x60] sm:$0xff] %vm869, %v865
    %883 = vst.msk [vmem:[%s2 + $0x68] sm:$0xff] %vm869, %v866
    %884 = vst.msk [vmem:[%s2 + $0x70] sm:$0xff] %vm869, %v867
    %885 = vst.msk [vmem:[%s2 + $0x78] sm:$0xff] %vm869, %v868
    %v886 = vld [vmem:[%s2] sm:$0xff]
    %v887 = vld [vmem:[%s2 + $0x8] sm:$0xff]
    %v888 = vld [vmem:[%s2 + $0x10] sm:$0xff]
    %v889 = vld [vmem:[%s2 + $0x18] sm:$0xff]
    %v890 = vld [vmem:[%s2 + $0x20] sm:$0xff]
    %v891 = vld [vmem:[%s2 + $0x28] sm:$0xff]
    %v892 = vld [vmem:[%s2 + $0x30] sm:$0xff]
    %v893 = vld [vmem:[%s2 + $0x38] sm:$0xff]
    %v894 = vld [vmem:[%s2 + $0x40] sm:$0xff]
    %v895 = vld [vmem:[%s2 + $0x48] sm:$0xff]
    %v896 = vld [vmem:[%s2 + $0x50] sm:$0xff]
    %v897 = vld [vmem:[%s2 + $0x58] sm:$0xff]
    %v898 = vld [vmem:[%s2 + $0x60] sm:$0xff]
    %v899 = vld [vmem:[%s2 + $0x68] sm:$0xff]
    %v900 = vld [vmem:[%s2 + $0x70] sm:$0xff]
    %v901 = vld [vmem:[%s2 + $0x78] sm:$0xff]
    %v902 = vld [vmem:[%s1] sm:$0xff]
    %v903 = vld [vmem:[%s1 + $0x8] sm:$0xff]
    %v904 = vld [vmem:[%s1 + $0x10] sm:$0xff]
    %v905 = vld [vmem:[%s1 + $0x18] sm:$0xff]
    %v906 = vld [vmem:[%s1 + $0x20] sm:$0xff]
    %v907 = vld [vmem:[%s1 + $0x28] sm:$0xff]
    %v908 = vld [vmem:[%s1 + $0x30] sm:$0xff]
    %v909 = vld [vmem:[%s1 + $0x38] sm:$0xff]
    %v910 = vld [vmem:[%s1 + $0x40] sm:$0xff]
    %v911 = vld [vmem:[%s1 + $0x48] sm:$0xff]
    %v912 = vld [vmem:[%s1 + $0x50] sm:$0xff]
    %v913 = vld [vmem:[%s1 + $0x58] sm:$0xff]
    %v914 = vld [vmem:[%s1 + $0x60] sm:$0xff]
    %v915 = vld [vmem:[%s1 + $0x68] sm:$0xff]
    %v916 = vld [vmem:[%s1 + $0x70] sm:$0xff]
    %v917 = vld [vmem:[%s1 + $0x78] sm:$0xff]
    %v918 = vmul.f32 %v772, %v902
    %v919 = vmul.f32 %v772, %v903
    %v920 = vmul.f32 %v772, %v904
    %v921 = vmul.f32 %v772, %v905
    %v922 = vmul.f32 %v772, %v906
    %v923 = vmul.f32 %v772, %v907
    %v924 = vmul.f32 %v772, %v908
    %v925 = vmul.f32 %v772, %v909
    %v926 = vmul.f32 %v772, %v910
    %v927 = vmul.f32 %v772, %v911
    %v928 = vmul.f32 %v772, %v912
    %v929 = vmul.f32 %v772, %v913
    %v930 = vmul.f32 %v772, %v914
    %v931 = vmul.f32 %v772, %v915
    %v932 = vmul.f32 %v772, %v916
    %v933 = vmul.f32 %v772, %v917
    %950 = vrot.lane.b32.xlu0 %v918, 1
    %v951 = vpop.permute.xlu0 %950
    %952 = vrot.lane.b32.xlu0 %v919, 1
    %v953 = vpop.permute.xlu0 %952
    %954 = vrot.lane.b32.xlu0 %v920, 1
    %v955 = vpop.permute.xlu0 %954
    %956 = vrot.lane.b32.xlu0 %v921, 1
    %v957 = vpop.permute.xlu0 %956
    %958 = vrot.lane.b32.xlu0 %v922, 1
    %v959 = vpop.permute.xlu0 %958
    %960 = vrot.lane.b32.xlu0 %v923, 1
    %v961 = vpop.permute.xlu0 %960
    %962 = vrot.lane.b32.xlu0 %v924, 1
    %v963 = vpop.permute.xlu0 %962
    %964 = vrot.lane.b32.xlu0 %v925, 1
    %v965 = vpop.permute.xlu0 %964
    %966 = vrot.lane.b32.xlu0 %v926, 1
    %v967 = vpop.permute.xlu0 %966
    %968 = vrot.lane.b32.xlu0 %v927, 1
    %v969 = vpop.permute.xlu0 %968
    %970 = vrot.lane.b32.xlu0 %v928, 1
    %v971 = vpop.permute.xlu0 %970
    %972 = vrot.lane.b32.xlu0 %v929, 1
    %v973 = vpop.permute.xlu0 %972
    %974 = vrot.lane.b32.xlu0 %v930, 1
    %v975 = vpop.permute.xlu0 %974
    %976 = vrot.lane.b32.xlu0 %v931, 1
    %v977 = vpop.permute.xlu0 %976
    %978 = vrot.lane.b32.xlu0 %v932, 1
    %v979 = vpop.permute.xlu0 %978
    %980 = vrot.lane.b32.xlu0 %v933, 1
    %v981 = vpop.permute.xlu0 %980
    %v998 = vadd.f32 %v886, %v951
    %v999 = vadd.f32 %v887, %v953
    %v1000 = vadd.f32 %v888, %v955
    %v1001 = vadd.f32 %v889, %v957
    %v1002 = vadd.f32 %v890, %v959
    %v1003 = vadd.f32 %v891, %v961
    %v1004 = vadd.f32 %v892, %v963
    %v1005 = vadd.f32 %v893, %v965
    %v1006 = vadd.f32 %v894, %v967
    %v1007 = vadd.f32 %v895, %v969
    %v1008 = vadd.f32 %v896, %v971
    %v1009 = vadd.f32 %v897, %v973
    %v1010 = vadd.f32 %v898, %v975
    %v1011 = vadd.f32 %v899, %v977
    %v1012 = vadd.f32 %v900, %v979
    %v1013 = vadd.f32 %v901, %v981
    %vm1014 = vcmask 130168
    %1015 = vst.msk [vmem:[%s2] sm:$0xff] %vm1014, %v998
    %1016 = vst.msk [vmem:[%s2 + $0x8] sm:$0xff] %vm1014, %v999
    %1017 = vst.msk [vmem:[%s2 + $0x10] sm:$0xff] %vm1014, %v1000
    %1018 = vst.msk [vmem:[%s2 + $0x18] sm:$0xff] %vm1014, %v1001
    %1019 = vst.msk [vmem:[%s2 + $0x20] sm:$0xff] %vm1014, %v1002
    %1020 = vst.msk [vmem:[%s2 + $0x28] sm:$0xff] %vm1014, %v1003
    %1021 = vst.msk [vmem:[%s2 + $0x30] sm:$0xff] %vm1014, %v1004
    %1022 = vst.msk [vmem:[%s2 + $0x38] sm:$0xff] %vm1014, %v1005
    %1023 = vst.msk [vmem:[%s2 + $0x40] sm:$0xff] %vm1014, %v1006
    %1024 = vst.msk [vmem:[%s2 + $0x48] sm:$0xff] %vm1014, %v1007
    %1025 = vst.msk [vmem:[%s2 + $0x50] sm:$0xff] %vm1014, %v1008
    %1026 = vst.msk [vmem:[%s2 + $0x58] sm:$0xff] %vm1014, %v1009
    %1027 = vst.msk [vmem:[%s2 + $0x60] sm:$0xff] %vm1014, %v1010
    %1028 = vst.msk [vmem:[%s2 + $0x68] sm:$0xff] %vm1014, %v1011
    %1029 = vst.msk [vmem:[%s2 + $0x70] sm:$0xff] %vm1014, %v1012
    %1030 = vst.msk [vmem:[%s2 + $0x78] sm:$0xff] %vm1014, %v1013
    %s1031 = sld [smem:[#allocation2 + $0x4]]
    %v1032 = vld [vmem:[%s2] sm:$0xff]
    %v1033 = vld [vmem:[%s2 + $0x8] sm:$0xff]
    %v1034 = vld [vmem:[%s2 + $0x10] sm:$0xff]
    %v1035 = vld [vmem:[%s2 + $0x18] sm:$0xff]
    %v1036 = vld [vmem:[%s2 + $0x20] sm:$0xff]
    %v1037 = vld [vmem:[%s2 + $0x28] sm:$0xff]
    %v1038 = vld [vmem:[%s2 + $0x30] sm:$0xff]
    %v1039 = vld [vmem:[%s2 + $0x38] sm:$0xff]
    %v1040 = vld [vmem:[%s2 + $0x40] sm:$0xff]
    %v1041 = vld [vmem:[%s2 + $0x48] sm:$0xff]
    %v1042 = vld [vmem:[%s2 + $0x50] sm:$0xff]
    %v1043 = vld [vmem:[%s2 + $0x58] sm:$0xff]
    %v1044 = vld [vmem:[%s2 + $0x60] sm:$0xff]
    %v1045 = vld [vmem:[%s2 + $0x68] sm:$0xff]
    %v1046 = vld [vmem:[%s2 + $0x70] sm:$0xff]
    %v1047 = vld [vmem:[%s2 + $0x78] sm:$0xff]
    %v1048 = vld [vmem:[%s1] sm:$0xff]
    %v1049 = vld [vmem:[%s1 + $0x8] sm:$0xff]
    %v1050 = vld [vmem:[%s1 + $0x10] sm:$0xff]
    %v1051 = vld [vmem:[%s1 + $0x18] sm:$0xff]
    %v1052 = vld [vmem:[%s1 + $0x20] sm:$0xff]
    %v1053 = vld [vmem:[%s1 + $0x28] sm:$0xff]
    %v1054 = vld [vmem:[%s1 + $0x30] sm:$0xff]
    %v1055 = vld [vmem:[%s1 + $0x38] sm:$0xff]
    %v1056 = vld [vmem:[%s1 + $0x40] sm:$0xff]
    %v1057 = vld [vmem:[%s1 + $0x48] sm:$0xff]
    %v1058 = vld [vmem:[%s1 + $0x50] sm:$0xff]
    %v1059 = vld [vmem:[%s1 + $0x58] sm:$0xff]
    %v1060 = vld [vmem:[%s1 + $0x60] sm:$0xff]
    %v1061 = vld [vmem:[%s1 + $0x68] sm:$0xff]
    %v1062 = vld [vmem:[%s1 + $0x70] sm:$0xff]
    %v1063 = vld [vmem:[%s1 + $0x78] sm:$0xff]
    %v1064 = vstv %s1031
    %v1065 = vmul.f32 %v1064, %v1048
    %v1066 = vmul.f32 %v1064, %v1049
    %v1067 = vmul.f32 %v1064, %v1050
    %v1068 = vmul.f32 %v1064, %v1051
    %v1069 = vmul.f32 %v1064, %v1052
    %v1070 = vmul.f32 %v1064, %v1053
    %v1071 = vmul.f32 %v1064, %v1054
    %v1072 = vmul.f32 %v1064, %v1055
    %v1073 = vmul.f32 %v1064, %v1056
    %v1074 = vmul.f32 %v1064, %v1057
    %v1075 = vmul.f32 %v1064, %v1058
    %v1076 = vmul.f32 %v1064, %v1059
    %v1077 = vmul.f32 %v1064, %v1060
    %v1078 = vmul.f32 %v1064, %v1061
    %v1079 = vmul.f32 %v1064, %v1062
    %v1080 = vmul.f32 %v1064, %v1063
    %1097 = vrot.lane.b32.xlu0 %v1065, 126
    %v1098 = vpop.permute.xlu0 %1097
    %1099 = vrot.lane.b32.xlu0 %v1066, 126
    %v1100 = vpop.permute.xlu0 %1099
    %1101 = vrot.lane.b32.xlu0 %v1067, 126
    %v1102 = vpop.permute.xlu0 %1101
    %1103 = vrot.lane.b32.xlu0 %v1068, 126
    %v1104 = vpop.permute.xlu0 %1103
    %1105 = vrot.lane.b32.xlu0 %v1069, 126
    %v1106 = vpop.permute.xlu0 %1105
    %1107 = vrot.lane.b32.xlu0 %v1070, 126
    %v1108 = vpop.permute.xlu0 %1107
    %1109 = vrot.lane.b32.xlu0 %v1071, 126
    %v1110 = vpop.permute.xlu0 %1109
    %1111 = vrot.lane.b32.xlu0 %v1072, 126
    %v1112 = vpop.permute.xlu0 %1111
    %1113 = vrot.lane.b32.xlu0 %v1073, 126
    %v1114 = vpop.permute.xlu0 %1113
    %1115 = vrot.lane.b32.xlu0 %v1074, 126
    %v1116 = vpop.permute.xlu0 %1115
    %1117 = vrot.lane.b32.xlu0 %v1075, 126
    %v1118 = vpop.permute.xlu0 %1117
    %1119 = vrot.lane.b32.xlu0 %v1076, 126
    %v1120 = vpop.permute.xlu0 %1119
    %1121 = vrot.lane.b32.xlu0 %v1077, 126
    %v1122 = vpop.permute.xlu0 %1121
    %1123 = vrot.lane.b32.xlu0 %v1078, 126
    %v1124 = vpop.permute.xlu0 %1123
    %1125 = vrot.lane.b32.xlu0 %v1079, 126
    %v1126 = vpop.permute.xlu0 %1125
    %1127 = vrot.lane.b32.xlu0 %v1080, 126
    %v1128 = vpop.permute.xlu0 %1127
    %v1145 = vadd.f32 %v1032, %v1098
    %v1146 = vadd.f32 %v1033, %v1100
    %v1147 = vadd.f32 %v1034, %v1102
    %v1148 = vadd.f32 %v1035, %v1104
    %v1149 = vadd.f32 %v1036, %v1106
    %v1150 = vadd.f32 %v1037, %v1108
    %v1151 = vadd.f32 %v1038, %v1110
    %v1152 = vadd.f32 %v1039, %v1112
    %v1153 = vadd.f32 %v1040, %v1114
    %v1154 = vadd.f32 %v1041, %v1116
    %v1155 = vadd.f32 %v1042, %v1118
    %v1156 = vadd.f32 %v1043, %v1120
    %v1157 = vadd.f32 %v1044, %v1122
    %v1158 = vadd.f32 %v1045, %v1124
    %v1159 = vadd.f32 %v1046, %v1126
    %v1160 = vadd.f32 %v1047, %v1128
    %vm1161 = vcmask 113664
    %1162 = vst.msk [vmem:[%s2] sm:$0xff] %vm1161, %v1145
    %1163 = vst.msk [vmem:[%s2 + $0x8] sm:$0xff] %vm1161, %v1146
    %1164 = vst.msk [vmem:[%s2 + $0x10] sm:$0xff] %vm1161, %v1147
    %1165 = vst.msk [vmem:[%s2 + $0x18] sm:$0xff] %vm1161, %v1148
    %1166 = vst.msk [vmem:[%s2 + $0x20] sm:$0xff] %vm1161, %v1149
    %1167 = vst.msk [vmem:[%s2 + $0x28] sm:$0xff] %vm1161, %v1150
    %1168 = vst.msk [vmem:[%s2 + $0x30] sm:$0xff] %vm1161, %v1151
    %1169 = vst.msk [vmem:[%s2 + $0x38] sm:$0xff] %vm1161, %v1152
    %1170 = vst.msk [vmem:[%s2 + $0x40] sm:$0xff] %vm1161, %v1153
    %1171 = vst.msk [vmem:[%s2 + $0x48] sm:$0xff] %vm1161, %v1154
    %1172 = vst.msk [vmem:[%s2 + $0x50] sm:$0xff] %vm1161, %v1155
    %1173 = vst.msk [vmem:[%s2 + $0x58] sm:$0xff] %vm1161, %v1156
    %1174 = vst.msk [vmem:[%s2 + $0x60] sm:$0xff] %vm1161, %v1157
    %1175 = vst.msk [vmem:[%s2 + $0x68] sm:$0xff] %vm1161, %v1158
    %1176 = vst.msk [vmem:[%s2 + $0x70] sm:$0xff] %vm1161, %v1159
    %1177 = vst.msk [vmem:[%s2 + $0x78] sm:$0xff] %vm1161, %v1160
    %v1178 = vld [vmem:[%s2] sm:$0xff]
    %v1179 = vld [vmem:[%s2 + $0x8] sm:$0xff]
    %v1180 = vld [vmem:[%s2 + $0x10] sm:$0xff]
    %v1181 = vld [vmem:[%s2 + $0x18] sm:$0xff]
    %v1182 = vld [vmem:[%s2 + $0x20] sm:$0xff]
    %v1183 = vld [vmem:[%s2 + $0x28] sm:$0xff]
    %v1184 = vld [vmem:[%s2 + $0x30] sm:$0xff]
    %v1185 = vld [vmem:[%s2 + $0x38] sm:$0xff]
    %v1186 = vld [vmem:[%s2 + $0x40] sm:$0xff]
    %v1187 = vld [vmem:[%s2 + $0x48] sm:$0xff]
    %v1188 = vld [vmem:[%s2 + $0x50] sm:$0xff]
    %v1189 = vld [vmem:[%s2 + $0x58] sm:$0xff]
    %v1190 = vld [vmem:[%s2 + $0x60] sm:$0xff]
    %v1191 = vld [vmem:[%s2 + $0x68] sm:$0xff]
    %v1192 = vld [vmem:[%s2 + $0x70] sm:$0xff]
    %v1193 = vld [vmem:[%s2 + $0x78] sm:$0xff]
    %v1194 = vld [vmem:[%s1] sm:$0xff]
    %v1195 = vld [vmem:[%s1 + $0x8] sm:$0xff]
    %v1196 = vld [vmem:[%s1 + $0x10] sm:$0xff]
    %v1197 = vld [vmem:[%s1 + $0x18] sm:$0xff]
    %v1198 = vld [vmem:[%s1 + $0x20] sm:$0xff]
    %v1199 = vld [vmem:[%s1 + $0x28] sm:$0xff]
    %v1200 = vld [vmem:[%s1 + $0x30] sm:$0xff]
    %v1201 = vld [vmem:[%s1 + $0x38] sm:$0xff]
    %v1202 = vld [vmem:[%s1 + $0x40] sm:$0xff]
    %v1203 = vld [vmem:[%s1 + $0x48] sm:$0xff]
    %v1204 = vld [vmem:[%s1 + $0x50] sm:$0xff]
    %v1205 = vld [vmem:[%s1 + $0x58] sm:$0xff]
    %v1206 = vld [vmem:[%s1 + $0x60] sm:$0xff]
    %v1207 = vld [vmem:[%s1 + $0x68] sm:$0xff]
    %v1208 = vld [vmem:[%s1 + $0x70] sm:$0xff]
    %v1209 = vld [vmem:[%s1 + $0x78] sm:$0xff]
    %v1210 = vmul.f32 %v1064, %v1194
    %v1211 = vmul.f32 %v1064, %v1195
    %v1212 = vmul.f32 %v1064, %v1196
    %v1213 = vmul.f32 %v1064, %v1197
    %v1214 = vmul.f32 %v1064, %v1198
    %v1215 = vmul.f32 %v1064, %v1199
    %v1216 = vmul.f32 %v1064, %v1200
    %v1217 = vmul.f32 %v1064, %v1201
    %v1218 = vmul.f32 %v1064, %v1202
    %v1219 = vmul.f32 %v1064, %v1203
    %v1220 = vmul.f32 %v1064, %v1204
    %v1221 = vmul.f32 %v1064, %v1205
    %v1222 = vmul.f32 %v1064, %v1206
    %v1223 = vmul.f32 %v1064, %v1207
    %v1224 = vmul.f32 %v1064, %v1208
    %v1225 = vmul.f32 %v1064, %v1209
    %v1226 = vadd.f32 %v1178, %v1210
    %v1227 = vadd.f32 %v1179, %v1211
    %v1228 = vadd.f32 %v1180, %v1212
    %v1229 = vadd.f32 %v1181, %v1213
    %v1230 = vadd.f32 %v1182, %v1214
    %v1231 = vadd.f32 %v1183, %v1215
    %v1232 = vadd.f32 %v1184, %v1216
    %v1233 = vadd.f32 %v1185, %v1217
    %v1234 = vadd.f32 %v1186, %v1218
    %v1235 = vadd.f32 %v1187, %v1219
    %v1236 = vadd.f32 %v1188, %v1220
    %v1237 = vadd.f32 %v1189, %v1221
    %v1238 = vadd.f32 %v1190, %v1222
    %v1239 = vadd.f32 %v1191, %v1223
    %v1240 = vadd.f32 %v1192, %v1224
    %v1241 = vadd.f32 %v1193, %v1225
    %vm1242 = vcmask 121968
    %1243 = vst.msk [vmem:[%s2] sm:$0xff] %vm1242, %v1226
    %1244 = vst.msk [vmem:[%s2 + $0x8] sm:$0xff] %vm1242, %v1227
    %1245 = vst.msk [vmem:[%s2 + $0x10] sm:$0xff] %vm1242, %v1228
    %1246 = vst.msk [vmem:[%s2 + $0x18] sm:$0xff] %vm1242, %v1229
    %1247 = vst.msk [vmem:[%s2 + $0x20] sm:$0xff] %vm1242, %v1230
    %1248 = vst.msk [vmem:[%s2 + $0x28] sm:$0xff] %vm1242, %v1231
    %1249 = vst.msk [vmem:[%s2 + $0x30] sm:$0xff] %vm1242, %v1232
    %1250 = vst.msk [vmem:[%s2 + $0x38] sm:$0xff] %vm1242, %v1233
    %1251 = vst.msk [vmem:[%s2 + $0x40] sm:$0xff] %vm1242, %v1234
    %1252 = vst.msk [vmem:[%s2 + $0x48] sm:$0xff] %vm1242, %v1235
    %1253 = vst.msk [vmem:[%s2 + $0x50] sm:$0xff] %vm1242, %v1236
    %1254 = vst.msk [vmem:[%s2 + $0x58] sm:$0xff] %vm1242, %v1237
    %1255 = vst.msk [vmem:[%s2 + $0x60] sm:$0xff] %vm1242, %v1238
    %1256 = vst.msk [vmem:[%s2 + $0x68] sm:$0xff] %vm1242, %v1239
    %1257 = vst.msk [vmem:[%s2 + $0x70] sm:$0xff] %vm1242, %v1240
    %1258 = vst.msk [vmem:[%s2 + $0x78] sm:$0xff] %vm1242, %v1241
    %v1259 = vld [vmem:[%s2] sm:$0xff]
    %v1260 = vld [vmem:[%s2 + $0x8] sm:$0xff]
    %v1261 = vld [vmem:[%s2 + $0x10] sm:$0xff]
    %v1262 = vld [vmem:[%s2 + $0x18] sm:$0xff]
    %v1263 = vld [vmem:[%s2 + $0x20] sm:$0xff]
    %v1264 = vld [vmem:[%s2 + $0x28] sm:$0xff]
    %v1265 = vld [vmem:[%s2 + $0x30] sm:$0xff]
    %v1266 = vld [vmem:[%s2 + $0x38] sm:$0xff]
    %v1267 = vld [vmem:[%s2 + $0x40] sm:$0xff]
    %v1268 = vld [vmem:[%s2 + $0x48] sm:$0xff]
    %v1269 = vld [vmem:[%s2 + $0x50] sm:$0xff]
    %v1270 = vld [vmem:[%s2 + $0x58] sm:$0xff]
    %v1271 = vld [vmem:[%s2 + $0x60] sm:$0xff]
    %v1272 = vld [vmem:[%s2 + $0x68] sm:$0xff]
    %v1273 = vld [vmem:[%s2 + $0x70] sm:$0xff]
    %v1274 = vld [vmem:[%s2 + $0x78] sm:$0xff]
    %v1275 = vld [vmem:[%s1] sm:$0xff]
    %v1276 = vld [vmem:[%s1 + $0x8] sm:$0xff]
    %v1277 = vld [vmem:[%s1 + $0x10] sm:$0xff]
    %v1278 = vld [vmem:[%s1 + $0x18] sm:$0xff]
    %v1279 = vld [vmem:[%s1 + $0x20] sm:$0xff]
    %v1280 = vld [vmem:[%s1 + $0x28] sm:$0xff]
    %v1281 = vld [vmem:[%s1 + $0x30] sm:$0xff]
    %v1282 = vld [vmem:[%s1 + $0x38] sm:$0xff]
    %v1283 = vld [vmem:[%s1 + $0x40] sm:$0xff]
    %v1284 = vld [vmem:[%s1 + $0x48] sm:$0xff]
    %v1285 = vld [vmem:[%s1 + $0x50] sm:$0xff]
    %v1286 = vld [vmem:[%s1 + $0x58] sm:$0xff]
    %v1287 = vld [vmem:[%s1 + $0x60] sm:$0xff]
    %v1288 = vld [vmem:[%s1 + $0x68] sm:$0xff]
    %v1289 = vld [vmem:[%s1 + $0x70] sm:$0xff]
    %v1290 = vld [vmem:[%s1 + $0x78] sm:$0xff]
    %v1291 = vmul.f32 %v1064, %v1275
    %v1292 = vmul.f32 %v1064, %v1276
    %v1293 = vmul.f32 %v1064, %v1277
    %v1294 = vmul.f32 %v1064, %v1278
    %v1295 = vmul.f32 %v1064, %v1279
    %v1296 = vmul.f32 %v1064, %v1280
    %v1297 = vmul.f32 %v1064, %v1281
    %v1298 = vmul.f32 %v1064, %v1282
    %v1299 = vmul.f32 %v1064, %v1283
    %v1300 = vmul.f32 %v1064, %v1284
    %v1301 = vmul.f32 %v1064, %v1285
    %v1302 = vmul.f32 %v1064, %v1286
    %v1303 = vmul.f32 %v1064, %v1287
    %v1304 = vmul.f32 %v1064, %v1288
    %v1305 = vmul.f32 %v1064, %v1289
    %v1306 = vmul.f32 %v1064, %v1290
    %1323 = vrot.lane.b32.xlu0 %v1291, 2
    %v1324 = vpop.permute.xlu0 %1323
    %1325 = vrot.lane.b32.xlu0 %v1292, 2
    %v1326 = vpop.permute.xlu0 %1325
    %1327 = vrot.lane.b32.xlu0 %v1293, 2
    %v1328 = vpop.permute.xlu0 %1327
    %1329 = vrot.lane.b32.xlu0 %v1294, 2
    %v1330 = vpop.permute.xlu0 %1329
    %1331 = vrot.lane.b32.xlu0 %v1295, 2
    %v1332 = vpop.permute.xlu0 %1331
    %1333 = vrot.lane.b32.xlu0 %v1296, 2
    %v1334 = vpop.permute.xlu0 %1333
    %1335 = vrot.lane.b32.xlu0 %v1297, 2
    %v1336 = vpop.permute.xlu0 %1335
    %1337 = vrot.lane.b32.xlu0 %v1298, 2
    %v1338 = vpop.permute.xlu0 %1337
    %1339 = vrot.lane.b32.xlu0 %v1299, 2
    %v1340 = vpop.permute.xlu0 %1339
    %1341 = vrot.lane.b32.xlu0 %v1300, 2
    %v1342 = vpop.permute.xlu0 %1341
    %1343 = vrot.lane.b32.xlu0 %v1301, 2
    %v1344 = vpop.permute.xlu0 %1343
    %1345 = vrot.lane.b32.xlu0 %v1302, 2
    %v1346 = vpop.permute.xlu0 %1345
    %1347 = vrot.lane.b32.xlu0 %v1303, 2
    %v1348 = vpop.permute.xlu0 %1347
    %1349 = vrot.lane.b32.xlu0 %v1304, 2
    %v1350 = vpop.permute.xlu0 %1349
    %1351 = vrot.lane.b32.xlu0 %v1305, 2
    %v1352 = vpop.permute.xlu0 %1351
    %1353 = vrot.lane.b32.xlu0 %v1306, 2
    %v1354 = vpop.permute.xlu0 %1353
    %v1371 = vadd.f32 %v1259, %v1324
    %v1372 = vadd.f32 %v1260, %v1326
    %v1373 = vadd.f32 %v1261, %v1328
    %v1374 = vadd.f32 %v1262, %v1330
    %v1375 = vadd.f32 %v1263, %v1332
    %v1376 = vadd.f32 %v1264, %v1334
    %v1377 = vadd.f32 %v1265, %v1336
    %v1378 = vadd.f32 %v1266, %v1338
    %v1379 = vadd.f32 %v1267, %v1340
    %v1380 = vadd.f32 %v1268, %v1342
    %v1381 = vadd.f32 %v1269, %v1344
    %v1382 = vadd.f32 %v1270, %v1346
    %v1383 = vadd.f32 %v1271, %v1348
    %v1384 = vadd.f32 %v1272, %v1350
    %v1385 = vadd.f32 %v1273, %v1352
    %v1386 = vadd.f32 %v1274, %v1354
    %1387 = vst.msk [vmem:[%s2] sm:$0xff] %vm1014, %v1371
    %1388 = vst.msk [vmem:[%s2 + $0x8] sm:$0xff] %vm1014, %v1372
    %1389 = vst.msk [vmem:[%s2 + $0x10] sm:$0xff] %vm1014, %v1373
    %1390 = vst.msk [vmem:[%s2 + $0x18] sm:$0xff] %vm1014, %v1374
    %1391 = vst.msk [vmem:[%s2 + $0x20] sm:$0xff] %vm1014, %v1375
    %1392 = vst.msk [vmem:[%s2 + $0x28] sm:$0xff] %vm1014, %v1376
    %1393 = vst.msk [vmem:[%s2 + $0x30] sm:$0xff] %vm1014, %v1377
    %1394 = vst.msk [vmem:[%s2 + $0x38] sm:$0xff] %vm1014, %v1378
    %1395 = vst.msk [vmem:[%s2 + $0x40] sm:$0xff] %vm1014, %v1379
    %1396 = vst.msk [vmem:[%s2 + $0x48] sm:$0xff] %vm1014, %v1380
    %1397 = vst.msk [vmem:[%s2 + $0x50] sm:$0xff] %vm1014, %v1381
    %1398 = vst.msk [vmem:[%s2 + $0x58] sm:$0xff] %vm1014, %v1382
    %1399 = vst.msk [vmem:[%s2 + $0x60] sm:$0xff] %vm1014, %v1383
    %1400 = vst.msk [vmem:[%s2 + $0x68] sm:$0xff] %vm1014, %v1384
    %1401 = vst.msk [vmem:[%s2 + $0x70] sm:$0xff] %vm1014, %v1385
    %1402 = vst.msk [vmem:[%s2 + $0x78] sm:$0xff] %vm1014, %v1386
    // Predicated region
    $region14: #{tpu_custom_call.1} parent=1 // pred_check
      _
    $region15: #{tpu_custom_call.1} parent=1 // pred_check_branch
      %1404 = sbr.rel (0) target = $region17
    $region16: #{tpu_custom_call.1} parent=1 // pred_region
      _
    $region17: #{tpu_custom_call.1} parent=1 // pred_fallthru
      _
    // Predicated region
    $region18: #{tpu_custom_call.1} parent=1 // pred_check
      _
    $region19: #{tpu_custom_call.1} parent=1 // pred_check_branch
      %1406 = sbr.rel (0) target = $region21
    $region20: #{tpu_custom_call.1} parent=1 // pred_region
      _
    $region21: #{tpu_custom_call.1} parent=1 // pred_fallthru
      _
    %1407 = vsyncpa [#allocation3], 1

</llo_original>
